<compile_context>
chip_gen: v5e
topology: v5e:2x2
jax: 0.10.0
libtpu: 0.0.40
codegen_flags: <defaults>
</compile_context>

<pallas_src>
import jax
import jax.numpy as jnp
from jax import lax
from jax.experimental import pallas as pl
from jax.experimental.pallas import tpu as pltpu


# ---------------------------------------------------------------------------
# Fused Pallas kernel (all LSTM layers + classifier)
# ---------------------------------------------------------------------------
def _make_fused_lstm_kernel(num_layers, T, Bp, H, Cp):
    """Builds the fused LSTM(+classifier) kernel for a fixed static config."""

    def kernel(*refs):
        # inputs: x, (wih_bf16, whh_bf16, bias_f32) * num_layers, w_cls, b_cls
        x_ref = refs[0]                                # (T, Bp, D)   f32
        layer_refs = refs[1:1 + 3 * num_layers]
        wcls_ref = refs[1 + 3 * num_layers]            # (H, Cp)      f32
        bcls_ref = refs[2 + 3 * num_layers]            # (1, Cp)      f32
        # outputs
        out_ref = refs[3 + 3 * num_layers]             # (Bp, Cp)     f32 (lane-dense)
        # scratch
        seq_scr = refs[4 + 3 * num_layers]             # (T, Bp, H)   inter-layer sequence
        gates_scr = refs[5 + 3 * num_layers]           # (T, Bp, 4H)  hoisted input gates

        h_last = jnp.zeros((Bp, H), jnp.float32)

        for layer in range(num_layers):
            wih_ref = layer_refs[3 * layer + 0]        # (in_dim, 4H) bf16
            whh_ref = layer_refs[3 * layer + 1]        # (H, 4H)      bf16
            b_ref = layer_refs[3 * layer + 2]          # (1, 4H)      f32 (g cols pre-scaled x2)

            seq_in = x_ref[...] if layer == 0 else seq_scr[...]   # f32
            in_dim = seq_in.shape[-1]

            # ---- Hoisted input projection: one big bf16 MXU matmul over all T*Bp rows.
            #      (Reshape is done in f32 so it stays tile-aligned; cast after.)
            g_all = (
                jnp.dot(
                    seq_in.reshape(T * Bp, in_dim).astype(jnp.bfloat16),
                    wih_ref[...],
                    preferred_element_type=jnp.float32,
                )
                + b_ref[...]
            )
            gates_scr[...] = g_all.reshape(T, Bp, 4 * H)

            whh = whh_ref[...]                          # hoist weight load out of the loop
            is_last_layer = layer == num_layers - 1

            def step(t, carry, whh=whh, is_last_layer=is_last_layer):
                h_prev, c_prev = carry
                gates = gates_scr[t] + jnp.dot(
                    h_prev.astype(jnp.bfloat16), whh,
                    preferred_element_type=jnp.float32)            # (Bp, 4H) f32
                # One full-width sigmoid pass over the lane-dense (Bp, 4H) block.
                # PyTorch gate order is i, f, g, o; the g columns were pre-scaled by 2
                # so tanh(x) = 2*sigmoid(2x) - 1 reuses this same sigmoid pass.
                sig = jax.nn.sigmoid(gates)
                i_g = sig[:, 0 * H:1 * H]
                f_g = sig[:, 1 * H:2 * H]
                g_g = 2.0 * sig[:, 2 * H:3 * H] - 1.0
                o_g = sig[:, 3 * H:4 * H]
                c_new = f_g * c_prev + i_g * g_g
                h_new = o_g * jnp.tanh(c_new)
                if not is_last_layer:                   # next layer consumes the sequence
                    seq_scr[t] = h_new
                return h_new, c_new

            h0 = jnp.zeros((Bp, H), jnp.float32)
            c0 = jnp.zeros((Bp, H), jnp.float32)
            # Full unroll only for short sequences; partial unroll avoids vreg spills
            # (64 vregs) at production T while keeping LLO scheduling visibility.
            unroll = True if T <= 16 else 8
            h_last, _ = lax.fori_loop(0, T, step, (h0, c0), unroll=unroll)

        # ---- Fused classifier on the last-step hidden state of the last layer.
        #      Output columns are padded to a multiple of 128 -> full-lane store.
        out_ref[...] = (
            jnp.dot(h_last, wcls_ref[...], preferred_element_type=jnp.float32)
            + bcls_ref[...]
        ).astype(out_ref.dtype)

    return kernel


# ---------------------------------------------------------------------------
# Wrapper
# ---------------------------------------------------------------------------
def my_lstm_forward(params, x_btd, add_data=None):
    """Forward pass of MyLSTM. x_btd: (B, T, D) batch_first. Returns (B, C) logits."""
    assert add_data is None  # add_data_dim=None in this configuration

    x = jnp.transpose(x_btd, (1, 0, 2)).astype(jnp.float32)   # (T, B, D) time-major
    T, B, D = x.shape
    layers = params["lstm"]
    L = len(layers)
    H = layers[0]["whh_t"].shape[0]
    C = params["cls_w_t"].shape[1]

    # Pad batch to a multiple of 8 sublanes: tile-aligned reshapes/stores in-kernel.
    # TODO(synk): at production batch, pad to 128 (v5e) / 256 (v6e/v7x) rows per tile
    # and shard batch tiles over a "parallel" grid axis (v7x megacore).
    Bp = max(8, ((B + 7) // 8) * 8)
    if Bp != B:
        x = jnp.pad(x, ((0, 0), (0, Bp - B), (0, 0)))

    # tanh-fold: pre-scale the g-gate (3rd quarter) columns of W_ih / W_hh / bias by 2.
    gate_scale = jnp.concatenate(
        [jnp.ones((2 * H,), jnp.float32),
         jnp.full((H,), 2.0, jnp.float32),
         jnp.ones((H,), jnp.float32)])[None, :]                  # (1, 4H)

    args = [x]
    in_specs = [pl.BlockSpec((T, Bp, D), lambda i: (0, 0, 0))]
    for lp in layers:
        in_dim = lp["wih_t"].shape[0]
        wih = (lp["wih_t"] * gate_scale).astype(jnp.bfloat16)    # bf16 MXU operands
        whh = (lp["whh_t"] * gate_scale).astype(jnp.bfloat16)
        bias = (lp["bias"] * gate_scale).astype(jnp.float32)     # bias stays f32
        args += [wih, whh, bias]
        in_specs += [
            pl.BlockSpec((in_dim, 4 * H), lambda i: (0, 0)),
            pl.BlockSpec((H, 4 * H), lambda i: (0, 0)),
            pl.BlockSpec((1, 4 * H), lambda i: (0, 0)),
        ]

    # Lane-dense classifier output: pad output columns to a multiple of 128.
    Cp = ((C + 127) // 128) * 128
    wcls = jnp.pad(params["cls_w_t"], ((0, 0), (0, Cp - C))).astype(jnp.float32)
    bcls = jnp.pad(params["cls_b"], ((0, 0), (0, Cp - C))).astype(jnp.float32)
    args += [wcls, bcls]
    in_specs += [
        pl.BlockSpec((H, Cp), lambda i: (0, 0)),
        pl.BlockSpec((1, Cp), lambda i: (0, 0)),
    ]

    kernel = _make_fused_lstm_kernel(L, T, Bp, H, Cp)

    logits_padded = pl.pallas_call(
        kernel,
        out_shape=jax.ShapeDtypeStruct((Bp, Cp), jnp.float32),
        grid_spec=pltpu.PrefetchScalarGridSpec(
            num_scalar_prefetch=0,
            grid=(1,),                       # single invocation; time loop is in-kernel
            in_specs=in_specs,
            out_specs=pl.BlockSpec((Bp, Cp), lambda i: (0, 0)),
            scratch_shapes=[
                pltpu.VMEM((T, Bp, H), jnp.float32),       # inter-layer sequence
                pltpu.VMEM((T, Bp, 4 * H), jnp.float32),   # hoisted input gates
            ],
        ),
        compiler_params=pltpu.CompilerParams(
            dimension_semantics=("arbitrary",),
            # Explicit, generation-safe VMEM budget (<= 64 MiB physical on v7x).
            vmem_limit_bytes=32 * 1024 * 1024,
        ),
    )(*args)
    return logits_padded[:B, :C]


# ---------------------------------------------------------------------------
# Parameter init (mimics PyTorch uniform(-1/sqrt(H), 1/sqrt(H)))
# ---------------------------------------------------------------------------
def init_params(key, input_dim, hidden_size, num_layers, num_classes):
    params = {"lstm": []}
    k = 1.0 / jnp.sqrt(hidden_size)
    for layer in range(num_layers):
        in_dim = input_dim if layer == 0 else hidden_size
        key, k1, k2, k3, k4 = jax.random.split(key, 5)
        w_ih = jax.random.uniform(k1, (4 * hidden_size, in_dim), jnp.float32, -k, k)
        w_hh = jax.random.uniform(k2, (4 * hidden_size, hidden_size), jnp.float32, -k, k)
        b_ih = jax.random.uniform(k3, (4 * hidden_size,), jnp.float32, -k, k)
        b_hh = jax.random.uniform(k4, (4 * hidden_size,), jnp.float32, -k, k)
        params["lstm"].append(
            {
                "wih_t": w_ih.T,                    # (in_dim, 4H)
                "whh_t": w_hh.T,                    # (H, 4H)
                "bias": (b_ih + b_hh)[None, :],     # (1, 4H)
            }
        )
    key, k1, k2 = jax.random.split(key, 3)
    w_cls = jax.random.uniform(k1, (num_classes, hidden_size), jnp.float32, -k, k)
    b_cls = jax.random.uniform(k2, (num_classes,), jnp.float32, -k, k)
    params["cls_w_t"] = w_cls.T                     # (H, C)
    params["cls_b"] = b_cls[None, :]                # (1, C)
    return params


# ---------------------------------------------------------------------------
# Pure-jnp reference (PyTorch eval semantics) for validation
# ---------------------------------------------------------------------------
def _reference_forward(params, x_btd):
    hp = jax.lax.Precision.HIGHEST
    x = x_btd.astype(jnp.float32)                   # (B, T, D)
    B = x.shape[0]
    for lp in params["lstm"]:
        H = lp["whh_t"].shape[0]
        h = jnp.zeros((B, H), jnp.float32)
        c = jnp.zeros((B, H), jnp.float32)
        outs = []
        for t in range(x.shape[1]):
            gates = (jnp.dot(x[:, t], lp["wih_t"], precision=hp)
                     + jnp.dot(h, lp["whh_t"], precision=hp)
                     + lp["bias"])
            i_g = jax.nn.sigmoid(gates[:, 0 * H:1 * H])
            f_g = jax.nn.sigmoid(gates[:, 1 * H:2 * H])
            g_g = jnp.tanh(gates[:, 2 * H:3 * H])
            o_g = jax.nn.sigmoid(gates[:, 3 * H:4 * H])
            c = f_g * c + i_g * g_g
            h = o_g * jnp.tanh(c)
            outs.append(h)
        x = jnp.stack(outs, axis=1)                 # (B, T, H)
    return jnp.dot(x[:, -1], params["cls_w_t"], precision=hp) + params["cls_b"]


# ---------------------------------------------------------------------------
if __name__ == "__main__":
    B, T, D = 4, 8, 16          # batch, seq, input_dim
    H, L, C = 32, 2, 3          # hidden_size, num_layers, num_classes

    key = jax.random.PRNGKey(0)
    key, xk = jax.random.split(key)
    x = jax.random.normal(xk, (B, T, D), dtype=jnp.float32)

    params = init_params(key, D, H, L, C)

    fwd = jax.jit(my_lstm_forward)
    logits = fwd(params, x)
    jax.block_until_ready(logits)
    assert logits.shape == (B, C), logits.shape

    ref = _reference_forward(params, x)
    assert jnp.allclose(logits, ref, atol=5e-2, rtol=5e-2), float(
        jnp.max(jnp.abs(logits - ref)))

    print("KERNEL_OK")
</pallas_src>

<mosaic_0001>
module attributes {stable_mosaic.version = 11 : i64} {
  func.func @kernel(%arg0: i32, %arg1: memref<8x8x16xf32, #tpu.memory_space<vmem>>, %arg2: memref<16x128xbf16, #tpu.memory_space<vmem>>, %arg3: memref<32x128xbf16, #tpu.memory_space<vmem>>, %arg4: memref<1x128xf32, #tpu.memory_space<vmem>>, %arg5: memref<32x128xbf16, #tpu.memory_space<vmem>>, %arg6: memref<32x128xbf16, #tpu.memory_space<vmem>>, %arg7: memref<1x128xf32, #tpu.memory_space<vmem>>, %arg8: memref<32x128xf32, #tpu.memory_space<vmem>>, %arg9: memref<1x128xf32, #tpu.memory_space<vmem>>, %arg10: memref<8x128xf32, #tpu.memory_space<vmem>>, %arg11: memref<8x8x32xf32, #tpu.memory_space<vmem>>, %arg12: memref<8x8x128xf32, #tpu.memory_space<vmem>>) attributes {dimension_semantics = [#tpu.dimension_semantics<arbitrary>], iteration_bounds = array<i64: 1>, scalar_prefetch = 0 : i64, scratch_operands = 2 : i64, tpu.core_type = #tpu.core_type<tc>, window_params = [{pipeline_mode = #tpu.pipeline_mode<synchronous>, transform_indices = @transform_0, window_bounds = array<i64: 8, 8, 16>}, {pipeline_mode = #tpu.pipeline_mode<synchronous>, transform_indices = @transform_1, window_bounds = array<i64: 16, 128>}, {pipeline_mode = #tpu.pipeline_mode<synchronous>, transform_indices = @transform_2, window_bounds = array<i64: 32, 128>}, {pipeline_mode = #tpu.pipeline_mode<synchronous>, transform_indices = @transform_3, window_bounds = array<i64: 1, 128>}, {pipeline_mode = #tpu.pipeline_mode<synchronous>, transform_indices = @transform_4, window_bounds = array<i64: 32, 128>}, {pipeline_mode = #tpu.pipeline_mode<synchronous>, transform_indices = @transform_5, window_bounds = array<i64: 32, 128>}, {pipeline_mode = #tpu.pipeline_mode<synchronous>, transform_indices = @transform_6, window_bounds = array<i64: 1, 128>}, {pipeline_mode = #tpu.pipeline_mode<synchronous>, transform_indices = @transform_7, window_bounds = array<i64: 32, 128>}, {pipeline_mode = #tpu.pipeline_mode<synchronous>, transform_indices = @transform_8, window_bounds = array<i64: 1, 128>}, {pipeline_mode = #tpu.pipeline_mode<synchronous>, transform_indices = @transform_9, window_bounds = array<i64: 8, 128>}]} {
    %c0 = arith.constant 0 : index
    %c0_0 = arith.constant 0 : index
    %c0_1 = arith.constant 0 : index
    %0 = vector.load %arg1[%c0, %c0_0, %c0_1] : memref<8x8x16xf32, #tpu.memory_space<vmem>>, vector<8x8x16xf32>
    %1 = vector.shape_cast %0 : vector<8x8x16xf32> to vector<64x16xf32>
    %2 = arith.truncf %1 : vector<64x16xf32> to vector<64x16xbf16>
    %c0_2 = arith.constant 0 : index
    %c0_3 = arith.constant 0 : index
    %3 = vector.load %arg2[%c0_2, %c0_3] : memref<16x128xbf16, #tpu.memory_space<vmem>>, vector<16x128xbf16>
    %cst = arith.constant dense<0.000000e+00> : vector<64x128xf32>
    %4 = tpu.matmul %2, %3, %cst {dimension_numbers = #tpu.dot_dimension_numbers<[1], [0], [0], [1], [0, 0, 1, 1], [], []>} : vector<64x16xbf16>, vector<16x128xbf16>, vector<64x128xf32> -> vector<64x128xf32>
    %c0_4 = arith.constant 0 : index
    %c0_5 = arith.constant 0 : index
    %5 = vector.load %arg4[%c0_4, %c0_5] : memref<1x128xf32, #tpu.memory_space<vmem>>, vector<1x128xf32>
    %6 = vector.broadcast %5 : vector<1x128xf32> to vector<64x128xf32>
    %7 = arith.addf %4, %6 : vector<64x128xf32>
    %8 = vector.shape_cast %7 : vector<64x128xf32> to vector<8x8x128xf32>
    %c0_6 = arith.constant 0 : index
    %c0_7 = arith.constant 0 : index
    %c0_8 = arith.constant 0 : index
    %9 = vector.load %arg12[%c0_6, %c0_7, %c0_8] : memref<8x8x128xf32, #tpu.memory_space<vmem>>, vector<8x8x128xf32>
    tpu.vector_store %arg12[%c0_6, %c0_7, %c0_8], %8 {strides = array<i32>} : memref<8x8x128xf32, #tpu.memory_space<vmem>>, vector<8x8x128xf32>,
    %c0_9 = arith.constant 0 : index
    %c0_10 = arith.constant 0 : index
    %10 = vector.load %arg3[%c0_9, %c0_10] : memref<32x128xbf16, #tpu.memory_space<vmem>>, vector<32x128xbf16>
    %cst_11 = arith.constant 0.000000e+00 : f32
    %11 = vector.broadcast %cst_11 : f32 to vector<8x32xf32>
    %cst_12 = arith.constant 0.000000e+00 : f32
    %12 = vector.broadcast %cst_12 : f32 to vector<8x32xf32>
    %c0_i32 = arith.constant 0 : i32
    %13 = arith.index_cast %c0_i32 : i32 to index
    %c0_13 = arith.constant 0 : index
    %c0_14 = arith.constant 0 : index
    %14 = vector.load %arg12[%13, %c0_13, %c0_14] : memref<8x8x128xf32, #tpu.memory_space<vmem>>, vector<1x8x128xf32>
    %15 = vector.shape_cast %14 : vector<1x8x128xf32> to vector<8x128xf32>
    %16 = arith.truncf %11 : vector<8x32xf32> to vector<8x32xbf16>
    %cst_15 = arith.constant dense<0.000000e+00> : vector<8x128xf32>
    %17 = tpu.matmul %16, %10, %cst_15 {dimension_numbers = #tpu.dot_dimension_numbers<[1], [0], [0], [1], [0, 0, 1, 1], [], []>} : vector<8x32xbf16>, vector<32x128xbf16>, vector<8x128xf32> -> vector<8x128xf32>
    %18 = arith.addf %15, %17 : vector<8x128xf32>
    %19 = arith.negf %18 : vector<8x128xf32>
    %20 = math.exp %19 : vector<8x128xf32>
    %cst_16 = arith.constant 1.000000e+00 : f32
    %21 = vector.broadcast %cst_16 : f32 to vector<8x128xf32>
    %22 = arith.addf %21, %20 : vector<8x128xf32>
    %23 = arith.divf %21, %22 : vector<8x128xf32>
    %24 = vector.extract_strided_slice %23 {offsets = [0, 0], sizes = [8, 32], strides = [1, 1]} : vector<8x128xf32> to vector<8x32xf32>
    %25 = vector.extract_strided_slice %23 {offsets = [0, 32], sizes = [8, 32], strides = [1, 1]} : vector<8x128xf32> to vector<8x32xf32>
    %26 = vector.extract_strided_slice %23 {offsets = [0, 64], sizes = [8, 32], strides = [1, 1]} : vector<8x128xf32> to vector<8x32xf32>
    %cst_17 = arith.constant 2.000000e+00 : f32
    %27 = vector.broadcast %cst_17 : f32 to vector<8x32xf32>
    %28 = arith.mulf %27, %26 : vector<8x32xf32>
    %cst_18 = arith.constant 1.000000e+00 : f32
    %29 = vector.broadcast %cst_18 : f32 to vector<8x32xf32>
    %30 = arith.subf %28, %29 : vector<8x32xf32>
    %31 = vector.extract_strided_slice %23 {offsets = [0, 96], sizes = [8, 32], strides = [1, 1]} : vector<8x128xf32> to vector<8x32xf32>
    %32 = arith.mulf %25, %12 : vector<8x32xf32>
    %33 = arith.mulf %24, %30 : vector<8x32xf32>
    %34 = arith.addf %32, %33 : vector<8x32xf32>
    %35 = math.tanh %34 : vector<8x32xf32>
    %36 = arith.mulf %31, %35 : vector<8x32xf32>
    %37 = arith.index_cast %c0_i32 : i32 to index
    %c0_19 = arith.constant 0 : index
    %c0_20 = arith.constant 0 : index
    %38 = vector.load %arg11[%37, %c0_19, %c0_20] : memref<8x8x32xf32, #tpu.memory_space<vmem>>, vector<1x8x32xf32>
    %39 = vector.shape_cast %38 : vector<1x8x32xf32> to vector<8x32xf32>
    %40 = vector.shape_cast %36 : vector<8x32xf32> to vector<1x8x32xf32>
    tpu.vector_store %arg11[%37, %c0_19, %c0_20], %40 {strides = array<i32>} : memref<8x8x32xf32, #tpu.memory_space<vmem>>, vector<1x8x32xf32>,
    %c1_i32 = arith.constant 1 : i32
    %41 = arith.index_cast %c1_i32 : i32 to index
    %c0_21 = arith.constant 0 : index
    %c0_22 = arith.constant 0 : index
    %42 = vector.load %arg12[%41, %c0_21, %c0_22] : memref<8x8x128xf32, #tpu.memory_space<vmem>>, vector<1x8x128xf32>
    %43 = vector.shape_cast %42 : vector<1x8x128xf32> to vector<8x128xf32>
    %44 = arith.truncf %36 : vector<8x32xf32> to vector<8x32xbf16>
    %cst_23 = arith.constant dense<0.000000e+00> : vector<8x128xf32>
    %45 = tpu.matmul %44, %10, %cst_23 {dimension_numbers = #tpu.dot_dimension_numbers<[1], [0], [0], [1], [0, 0, 1, 1], [], []>} : vector<8x32xbf16>, vector<32x128xbf16>, vector<8x128xf32> -> vector<8x128xf32>
    %46 = arith.addf %43, %45 : vector<8x128xf32>
    %47 = arith.negf %46 : vector<8x128xf32>
    %48 = math.exp %47 : vector<8x128xf32>
    %cst_24 = arith.constant 1.000000e+00 : f32
    %49 = vector.broadcast %cst_24 : f32 to vector<8x128xf32>
    %50 = arith.addf %49, %48 : vector<8x128xf32>
    %51 = arith.divf %49, %50 : vector<8x128xf32>
    %52 = vector.extract_strided_slice %51 {offsets = [0, 0], sizes = [8, 32], strides = [1, 1]} : vector<8x128xf32> to vector<8x32xf32>
    %53 = vector.extract_strided_slice %51 {offsets = [0, 32], sizes = [8, 32], strides = [1, 1]} : vector<8x128xf32> to vector<8x32xf32>
    %54 = vector.extract_strided_slice %51 {offsets = [0, 64], sizes = [8, 32], strides = [1, 1]} : vector<8x128xf32> to vector<8x32xf32>
    %cst_25 = arith.constant 2.000000e+00 : f32
    %55 = vector.broadcast %cst_25 : f32 to vector<8x32xf32>
    %56 = arith.mulf %55, %54 : vector<8x32xf32>
    %cst_26 = arith.constant 1.000000e+00 : f32
    %57 = vector.broadcast %cst_26 : f32 to vector<8x32xf32>
    %58 = arith.subf %56, %57 : vector<8x32xf32>
    %59 = vector.extract_strided_slice %51 {offsets = [0, 96], sizes = [8, 32], strides = [1, 1]} : vector<8x128xf32> to vector<8x32xf32>
    %60 = arith.mulf %53, %34 : vector<8x32xf32>
    %61 = arith.mulf %52, %58 : vector<8x32xf32>
    %62 = arith.addf %60, %61 : vector<8x32xf32>
    %63 = math.tanh %62 : vector<8x32xf32>
    %64 = arith.mulf %59, %63 : vector<8x32xf32>
    %65 = arith.index_cast %c1_i32 : i32 to index
    %c0_27 = arith.constant 0 : index
    %c0_28 = arith.constant 0 : index
    %66 = vector.load %arg11[%65, %c0_27, %c0_28] : memref<8x8x32xf32, #tpu.memory_space<vmem>>, vector<1x8x32xf32>
    %67 = vector.shape_cast %66 : vector<1x8x32xf32> to vector<8x32xf32>
    %68 = vector.shape_cast %64 : vector<8x32xf32> to vector<1x8x32xf32>
    tpu.vector_store %arg11[%65, %c0_27, %c0_28], %68 {strides = array<i32>} : memref<8x8x32xf32, #tpu.memory_space<vmem>>, vector<1x8x32xf32>,
    %c2_i32 = arith.constant 2 : i32
    %69 = arith.index_cast %c2_i32 : i32 to index
    %c0_29 = arith.constant 0 : index
    %c0_30 = arith.constant 0 : index
    %70 = vector.load %arg12[%69, %c0_29, %c0_30] : memref<8x8x128xf32, #tpu.memory_space<vmem>>, vector<1x8x128xf32>
    %71 = vector.shape_cast %70 : vector<1x8x128xf32> to vector<8x128xf32>
    %72 = arith.truncf %64 : vector<8x32xf32> to vector<8x32xbf16>
    %cst_31 = arith.constant dense<0.000000e+00> : vector<8x128xf32>
    %73 = tpu.matmul %72, %10, %cst_31 {dimension_numbers = #tpu.dot_dimension_numbers<[1], [0], [0], [1], [0, 0, 1, 1], [], []>} : vector<8x32xbf16>, vector<32x128xbf16>, vector<8x128xf32> -> vector<8x128xf32>
    %74 = arith.addf %71, %73 : vector<8x128xf32>
    %75 = arith.negf %74 : vector<8x128xf32>
    %76 = math.exp %75 : vector<8x128xf32>
    %cst_32 = arith.constant 1.000000e+00 : f32
    %77 = vector.broadcast %cst_32 : f32 to vector<8x128xf32>
    %78 = arith.addf %77, %76 : vector<8x128xf32>
    %79 = arith.divf %77, %78 : vector<8x128xf32>
    %80 = vector.extract_strided_slice %79 {offsets = [0, 0], sizes = [8, 32], strides = [1, 1]} : vector<8x128xf32> to vector<8x32xf32>
    %81 = vector.extract_strided_slice %79 {offsets = [0, 32], sizes = [8, 32], strides = [1, 1]} : vector<8x128xf32> to vector<8x32xf32>
    %82 = vector.extract_strided_slice %79 {offsets = [0, 64], sizes = [8, 32], strides = [1, 1]} : vector<8x128xf32> to vector<8x32xf32>
    %cst_33 = arith.constant 2.000000e+00 : f32
    %83 = vector.broadcast %cst_33 : f32 to vector<8x32xf32>
    %84 = arith.mulf %83, %82 : vector<8x32xf32>
    %cst_34 = arith.constant 1.000000e+00 : f32
    %85 = vector.broadcast %cst_34 : f32 to vector<8x32xf32>
    %86 = arith.subf %84, %85 : vector<8x32xf32>
    %87 = vector.extract_strided_slice %79 {offsets = [0, 96], sizes = [8, 32], strides = [1, 1]} : vector<8x128xf32> to vector<8x32xf32>
    %88 = arith.mulf %81, %62 : vector<8x32xf32>
    %89 = arith.mulf %80, %86 : vector<8x32xf32>
    %90 = arith.addf %88, %89 : vector<8x32xf32>
    %91 = math.tanh %90 : vector<8x32xf32>
    %92 = arith.mulf %87, %91 : vector<8x32xf32>
    %93 = arith.index_cast %c2_i32 : i32 to index
    %c0_35 = arith.constant 0 : index
    %c0_36 = arith.constant 0 : index
    %94 = vector.load %arg11[%93, %c0_35, %c0_36] : memref<8x8x32xf32, #tpu.memory_space<vmem>>, vector<1x8x32xf32>
    %95 = vector.shape_cast %94 : vector<1x8x32xf32> to vector<8x32xf32>
    %96 = vector.shape_cast %92 : vector<8x32xf32> to vector<1x8x32xf32>
    tpu.vector_store %arg11[%93, %c0_35, %c0_36], %96 {strides = array<i32>} : memref<8x8x32xf32, #tpu.memory_space<vmem>>, vector<1x8x32xf32>,
    %c3_i32 = arith.constant 3 : i32
    %97 = arith.index_cast %c3_i32 : i32 to index
    %c0_37 = arith.constant 0 : index
    %c0_38 = arith.constant 0 : index
    %98 = vector.load %arg12[%97, %c0_37, %c0_38] : memref<8x8x128xf32, #tpu.memory_space<vmem>>, vector<1x8x128xf32>
    %99 = vector.shape_cast %98 : vector<1x8x128xf32> to vector<8x128xf32>
    %100 = arith.truncf %92 : vector<8x32xf32> to vector<8x32xbf16>
    %cst_39 = arith.constant dense<0.000000e+00> : vector<8x128xf32>
    %101 = tpu.matmul %100, %10, %cst_39 {dimension_numbers = #tpu.dot_dimension_numbers<[1], [0], [0], [1], [0, 0, 1, 1], [], []>} : vector<8x32xbf16>, vector<32x128xbf16>, vector<8x128xf32> -> vector<8x128xf32>
    %102 = arith.addf %99, %101 : vector<8x128xf32>
    %103 = arith.negf %102 : vector<8x128xf32>
    %104 = math.exp %103 : vector<8x128xf32>
    %cst_40 = arith.constant 1.000000e+00 : f32
    %105 = vector.broadcast %cst_40 : f32 to vector<8x128xf32>
    %106 = arith.addf %105, %104 : vector<8x128xf32>
    %107 = arith.divf %105, %106 : vector<8x128xf32>
    %108 = vector.extract_strided_slice %107 {offsets = [0, 0], sizes = [8, 32], strides = [1, 1]} : vector<8x128xf32> to vector<8x32xf32>
    %109 = vector.extract_strided_slice %107 {offsets = [0, 32], sizes = [8, 32], strides = [1, 1]} : vector<8x128xf32> to vector<8x32xf32>
    %110 = vector.extract_strided_slice %107 {offsets = [0, 64], sizes = [8, 32], strides = [1, 1]} : vector<8x128xf32> to vector<8x32xf32>
    %cst_41 = arith.constant 2.000000e+00 : f32
    %111 = vector.broadcast %cst_41 : f32 to vector<8x32xf32>
    %112 = arith.mulf %111, %110 : vector<8x32xf32>
    %cst_42 = arith.constant 1.000000e+00 : f32
    %113 = vector.broadcast %cst_42 : f32 to vector<8x32xf32>
    %114 = arith.subf %112, %113 : vector<8x32xf32>
    %115 = vector.extract_strided_slice %107 {offsets = [0, 96], sizes = [8, 32], strides = [1, 1]} : vector<8x128xf32> to vector<8x32xf32>
    %116 = arith.mulf %109, %90 : vector<8x32xf32>
    %117 = arith.mulf %108, %114 : vector<8x32xf32>
    %118 = arith.addf %116, %117 : vector<8x32xf32>
    %119 = math.tanh %118 : vector<8x32xf32>
    %120 = arith.mulf %115, %119 : vector<8x32xf32>
    %121 = arith.index_cast %c3_i32 : i32 to index
    %c0_43 = arith.constant 0 : index
    %c0_44 = arith.constant 0 : index
    %122 = vector.load %arg11[%121, %c0_43, %c0_44] : memref<8x8x32xf32, #tpu.memory_space<vmem>>, vector<1x8x32xf32>
    %123 = vector.shape_cast %122 : vector<1x8x32xf32> to vector<8x32xf32>
    %124 = vector.shape_cast %120 : vector<8x32xf32> to vector<1x8x32xf32>
    tpu.vector_store %arg11[%121, %c0_43, %c0_44], %124 {strides = array<i32>} : memref<8x8x32xf32, #tpu.memory_space<vmem>>, vector<1x8x32xf32>,
    %c4_i32 = arith.constant 4 : i32
    %125 = arith.index_cast %c4_i32 : i32 to index
    %c0_45 = arith.constant 0 : index
    %c0_46 = arith.constant 0 : index
    %126 = vector.load %arg12[%125, %c0_45, %c0_46] : memref<8x8x128xf32, #tpu.memory_space<vmem>>, vector<1x8x128xf32>
    %127 = vector.shape_cast %126 : vector<1x8x128xf32> to vector<8x128xf32>
    %128 = arith.truncf %120 : vector<8x32xf32> to vector<8x32xbf16>
    %cst_47 = arith.constant dense<0.000000e+00> : vector<8x128xf32>
    %129 = tpu.matmul %128, %10, %cst_47 {dimension_numbers = #tpu.dot_dimension_numbers<[1], [0], [0], [1], [0, 0, 1, 1], [], []>} : vector<8x32xbf16>, vector<32x128xbf16>, vector<8x128xf32> -> vector<8x128xf32>
    %130 = arith.addf %127, %129 : vector<8x128xf32>
    %131 = arith.negf %130 : vector<8x128xf32>
    %132 = math.exp %131 : vector<8x128xf32>
    %cst_48 = arith.constant 1.000000e+00 : f32
    %133 = vector.broadcast %cst_48 : f32 to vector<8x128xf32>
    %134 = arith.addf %133, %132 : vector<8x128xf32>
    %135 = arith.divf %133, %134 : vector<8x128xf32>
    %136 = vector.extract_strided_slice %135 {offsets = [0, 0], sizes = [8, 32], strides = [1, 1]} : vector<8x128xf32> to vector<8x32xf32>
    %137 = vector.extract_strided_slice %135 {offsets = [0, 32], sizes = [8, 32], strides = [1, 1]} : vector<8x128xf32> to vector<8x32xf32>
    %138 = vector.extract_strided_slice %135 {offsets = [0, 64], sizes = [8, 32], strides = [1, 1]} : vector<8x128xf32> to vector<8x32xf32>
    %cst_49 = arith.constant 2.000000e+00 : f32
    %139 = vector.broadcast %cst_49 : f32 to vector<8x32xf32>
    %140 = arith.mulf %139, %138 : vector<8x32xf32>
    %cst_50 = arith.constant 1.000000e+00 : f32
    %141 = vector.broadcast %cst_50 : f32 to vector<8x32xf32>
    %142 = arith.subf %140, %141 : vector<8x32xf32>
    %143 = vector.extract_strided_slice %135 {offsets = [0, 96], sizes = [8, 32], strides = [1, 1]} : vector<8x128xf32> to vector<8x32xf32>
    %144 = arith.mulf %137, %118 : vector<8x32xf32>
    %145 = arith.mulf %136, %142 : vector<8x32xf32>
    %146 = arith.addf %144, %145 : vector<8x32xf32>
    %147 = math.tanh %146 : vector<8x32xf32>
    %148 = arith.mulf %143, %147 : vector<8x32xf32>
    %149 = arith.index_cast %c4_i32 : i32 to index
    %c0_51 = arith.constant 0 : index
    %c0_52 = arith.constant 0 : index
    %150 = vector.load %arg11[%149, %c0_51, %c0_52] : memref<8x8x32xf32, #tpu.memory_space<vmem>>, vector<1x8x32xf32>
    %151 = vector.shape_cast %150 : vector<1x8x32xf32> to vector<8x32xf32>
    %152 = vector.shape_cast %148 : vector<8x32xf32> to vector<1x8x32xf32>
    tpu.vector_store %arg11[%149, %c0_51, %c0_52], %152 {strides = array<i32>} : memref<8x8x32xf32, #tpu.memory_space<vmem>>, vector<1x8x32xf32>,
    %c5_i32 = arith.constant 5 : i32
    %153 = arith.index_cast %c5_i32 : i32 to index
    %c0_53 = arith.constant 0 : index
    %c0_54 = arith.constant 0 : index
    %154 = vector.load %arg12[%153, %c0_53, %c0_54] : memref<8x8x128xf32, #tpu.memory_space<vmem>>, vector<1x8x128xf32>
    %155 = vector.shape_cast %154 : vector<1x8x128xf32> to vector<8x128xf32>
    %156 = arith.truncf %148 : vector<8x32xf32> to vector<8x32xbf16>
    %cst_55 = arith.constant dense<0.000000e+00> : vector<8x128xf32>
    %157 = tpu.matmul %156, %10, %cst_55 {dimension_numbers = #tpu.dot_dimension_numbers<[1], [0], [0], [1], [0, 0, 1, 1], [], []>} : vector<8x32xbf16>, vector<32x128xbf16>, vector<8x128xf32> -> vector<8x128xf32>
    %158 = arith.addf %155, %157 : vector<8x128xf32>
    %159 = arith.negf %158 : vector<8x128xf32>
    %160 = math.exp %159 : vector<8x128xf32>
    %cst_56 = arith.constant 1.000000e+00 : f32
    %161 = vector.broadcast %cst_56 : f32 to vector<8x128xf32>
    %162 = arith.addf %161, %160 : vector<8x128xf32>
    %163 = arith.divf %161, %162 : vector<8x128xf32>
    %164 = vector.extract_strided_slice %163 {offsets = [0, 0], sizes = [8, 32], strides = [1, 1]} : vector<8x128xf32> to vector<8x32xf32>
    %165 = vector.extract_strided_slice %163 {offsets = [0, 32], sizes = [8, 32], strides = [1, 1]} : vector<8x128xf32> to vector<8x32xf32>
    %166 = vector.extract_strided_slice %163 {offsets = [0, 64], sizes = [8, 32], strides = [1, 1]} : vector<8x128xf32> to vector<8x32xf32>
    %cst_57 = arith.constant 2.000000e+00 : f32
    %167 = vector.broadcast %cst_57 : f32 to vector<8x32xf32>
    %168 = arith.mulf %167, %166 : vector<8x32xf32>
    %cst_58 = arith.constant 1.000000e+00 : f32
    %169 = vector.broadcast %cst_58 : f32 to vector<8x32xf32>
    %170 = arith.subf %168, %169 : vector<8x32xf32>
    %171 = vector.extract_strided_slice %163 {offsets = [0, 96], sizes = [8, 32], strides = [1, 1]} : vector<8x128xf32> to vector<8x32xf32>
    %172 = arith.mulf %165, %146 : vector<8x32xf32>
    %173 = arith.mulf %164, %170 : vector<8x32xf32>
    %174 = arith.addf %172, %173 : vector<8x32xf32>
    %175 = math.tanh %174 : vector<8x32xf32>
    %176 = arith.mulf %171, %175 : vector<8x32xf32>
    %177 = arith.index_cast %c5_i32 : i32 to index
    %c0_59 = arith.constant 0 : index
    %c0_60 = arith.constant 0 : index
    %178 = vector.load %arg11[%177, %c0_59, %c0_60] : memref<8x8x32xf32, #tpu.memory_space<vmem>>, vector<1x8x32xf32>
    %179 = vector.shape_cast %178 : vector<1x8x32xf32> to vector<8x32xf32>
    %180 = vector.shape_cast %176 : vector<8x32xf32> to vector<1x8x32xf32>
    tpu.vector_store %arg11[%177, %c0_59, %c0_60], %180 {strides = array<i32>} : memref<8x8x32xf32, #tpu.memory_space<vmem>>, vector<1x8x32xf32>,
    %c6_i32 = arith.constant 6 : i32
    %181 = arith.index_cast %c6_i32 : i32 to index
    %c0_61 = arith.constant 0 : index
    %c0_62 = arith.constant 0 : index
    %182 = vector.load %arg12[%181, %c0_61, %c0_62] : memref<8x8x128xf32, #tpu.memory_space<vmem>>, vector<1x8x128xf32>
    %183 = vector.shape_cast %182 : vector<1x8x128xf32> to vector<8x128xf32>
    %184 = arith.truncf %176 : vector<8x32xf32> to vector<8x32xbf16>
    %cst_63 = arith.constant dense<0.000000e+00> : vector<8x128xf32>
    %185 = tpu.matmul %184, %10, %cst_63 {dimension_numbers = #tpu.dot_dimension_numbers<[1], [0], [0], [1], [0, 0, 1, 1], [], []>} : vector<8x32xbf16>, vector<32x128xbf16>, vector<8x128xf32> -> vector<8x128xf32>
    %186 = arith.addf %183, %185 : vector<8x128xf32>
    %187 = arith.negf %186 : vector<8x128xf32>
    %188 = math.exp %187 : vector<8x128xf32>
    %cst_64 = arith.constant 1.000000e+00 : f32
    %189 = vector.broadcast %cst_64 : f32 to vector<8x128xf32>
    %190 = arith.addf %189, %188 : vector<8x128xf32>
    %191 = arith.divf %189, %190 : vector<8x128xf32>
    %192 = vector.extract_strided_slice %191 {offsets = [0, 0], sizes = [8, 32], strides = [1, 1]} : vector<8x128xf32> to vector<8x32xf32>
    %193 = vector.extract_strided_slice %191 {offsets = [0, 32], sizes = [8, 32], strides = [1, 1]} : vector<8x128xf32> to vector<8x32xf32>
    %194 = vector.extract_strided_slice %191 {offsets = [0, 64], sizes = [8, 32], strides = [1, 1]} : vector<8x128xf32> to vector<8x32xf32>
    %cst_65 = arith.constant 2.000000e+00 : f32
    %195 = vector.broadcast %cst_65 : f32 to vector<8x32xf32>
    %196 = arith.mulf %195, %194 : vector<8x32xf32>
    %cst_66 = arith.constant 1.000000e+00 : f32
    %197 = vector.broadcast %cst_66 : f32 to vector<8x32xf32>
    %198 = arith.subf %196, %197 : vector<8x32xf32>
    %199 = vector.extract_strided_slice %191 {offsets = [0, 96], sizes = [8, 32], strides = [1, 1]} : vector<8x128xf32> to vector<8x32xf32>
    %200 = arith.mulf %193, %174 : vector<8x32xf32>
    %201 = arith.mulf %192, %198 : vector<8x32xf32>
    %202 = arith.addf %200, %201 : vector<8x32xf32>
    %203 = math.tanh %202 : vector<8x32xf32>
    %204 = arith.mulf %199, %203 : vector<8x32xf32>
    %205 = arith.index_cast %c6_i32 : i32 to index
    %c0_67 = arith.constant 0 : index
    %c0_68 = arith.constant 0 : index
    %206 = vector.load %arg11[%205, %c0_67, %c0_68] : memref<8x8x32xf32, #tpu.memory_space<vmem>>, vector<1x8x32xf32>
    %207 = vector.shape_cast %206 : vector<1x8x32xf32> to vector<8x32xf32>
    %208 = vector.shape_cast %204 : vector<8x32xf32> to vector<1x8x32xf32>
    tpu.vector_store %arg11[%205, %c0_67, %c0_68], %208 {strides = array<i32>} : memref<8x8x32xf32, #tpu.memory_space<vmem>>, vector<1x8x32xf32>,
    %c7_i32 = arith.constant 7 : i32
    %209 = arith.index_cast %c7_i32 : i32 to index
    %c0_69 = arith.constant 0 : index
    %c0_70 = arith.constant 0 : index
    %210 = vector.load %arg12[%209, %c0_69, %c0_70] : memref<8x8x128xf32, #tpu.memory_space<vmem>>, vector<1x8x128xf32>
    %211 = vector.shape_cast %210 : vector<1x8x128xf32> to vector<8x128xf32>
    %212 = arith.truncf %204 : vector<8x32xf32> to vector<8x32xbf16>
    %cst_71 = arith.constant dense<0.000000e+00> : vector<8x128xf32>
    %213 = tpu.matmul %212, %10, %cst_71 {dimension_numbers = #tpu.dot_dimension_numbers<[1], [0], [0], [1], [0, 0, 1, 1], [], []>} : vector<8x32xbf16>, vector<32x128xbf16>, vector<8x128xf32> -> vector<8x128xf32>
    %214 = arith.addf %211, %213 : vector<8x128xf32>
    %215 = arith.negf %214 : vector<8x128xf32>
    %216 = math.exp %215 : vector<8x128xf32>
    %cst_72 = arith.constant 1.000000e+00 : f32
    %217 = vector.broadcast %cst_72 : f32 to vector<8x128xf32>
    %218 = arith.addf %217, %216 : vector<8x128xf32>
    %219 = arith.divf %217, %218 : vector<8x128xf32>
    %220 = vector.extract_strided_slice %219 {offsets = [0, 0], sizes = [8, 32], strides = [1, 1]} : vector<8x128xf32> to vector<8x32xf32>
    %221 = vector.extract_strided_slice %219 {offsets = [0, 32], sizes = [8, 32], strides = [1, 1]} : vector<8x128xf32> to vector<8x32xf32>
    %222 = vector.extract_strided_slice %219 {offsets = [0, 64], sizes = [8, 32], strides = [1, 1]} : vector<8x128xf32> to vector<8x32xf32>
    %cst_73 = arith.constant 2.000000e+00 : f32
    %223 = vector.broadcast %cst_73 : f32 to vector<8x32xf32>
    %224 = arith.mulf %223, %222 : vector<8x32xf32>
    %cst_74 = arith.constant 1.000000e+00 : f32
    %225 = vector.broadcast %cst_74 : f32 to vector<8x32xf32>
    %226 = arith.subf %224, %225 : vector<8x32xf32>
    %227 = vector.extract_strided_slice %219 {offsets = [0, 96], sizes = [8, 32], strides = [1, 1]} : vector<8x128xf32> to vector<8x32xf32>
    %228 = arith.mulf %221, %202 : vector<8x32xf32>
    %229 = arith.mulf %220, %226 : vector<8x32xf32>
    %230 = arith.addf %228, %229 : vector<8x32xf32>
    %231 = math.tanh %230 : vector<8x32xf32>
    %232 = arith.mulf %227, %231 : vector<8x32xf32>
    %233 = arith.index_cast %c7_i32 : i32 to index
    %c0_75 = arith.constant 0 : index
    %c0_76 = arith.constant 0 : index
    %234 = vector.load %arg11[%233, %c0_75, %c0_76] : memref<8x8x32xf32, #tpu.memory_space<vmem>>, vector<1x8x32xf32>
    %235 = vector.shape_cast %234 : vector<1x8x32xf32> to vector<8x32xf32>
    %236 = vector.shape_cast %232 : vector<8x32xf32> to vector<1x8x32xf32>
    tpu.vector_store %arg11[%233, %c0_75, %c0_76], %236 {strides = array<i32>} : memref<8x8x32xf32, #tpu.memory_space<vmem>>, vector<1x8x32xf32>,
    %c8_i32 = arith.constant 8 : i32
    %c0_77 = arith.constant 0 : index
    %c0_78 = arith.constant 0 : index
    %c0_79 = arith.constant 0 : index
    %237 = vector.load %arg11[%c0_77, %c0_78, %c0_79] : memref<8x8x32xf32, #tpu.memory_space<vmem>>, vector<8x8x32xf32>
    %238 = vector.shape_cast %237 : vector<8x8x32xf32> to vector<64x32xf32>
    %239 = arith.truncf %238 : vector<64x32xf32> to vector<64x32xbf16>
    %c0_80 = arith.constant 0 : index
    %c0_81 = arith.constant 0 : index
    %240 = vector.load %arg5[%c0_80, %c0_81] : memref<32x128xbf16, #tpu.memory_space<vmem>>, vector<32x128xbf16>
    %cst_82 = arith.constant dense<0.000000e+00> : vector<64x128xf32>
    %241 = tpu.matmul %239, %240, %cst_82 {dimension_numbers = #tpu.dot_dimension_numbers<[1], [0], [0], [1], [0, 0, 1, 1], [], []>} : vector<64x32xbf16>, vector<32x128xbf16>, vector<64x128xf32> -> vector<64x128xf32>
    %c0_83 = arith.constant 0 : index
    %c0_84 = arith.constant 0 : index
    %242 = vector.load %arg7[%c0_83, %c0_84] : memref<1x128xf32, #tpu.memory_space<vmem>>, vector<1x128xf32>
    %243 = vector.broadcast %242 : vector<1x128xf32> to vector<64x128xf32>
    %244 = arith.addf %241, %243 : vector<64x128xf32>
    %245 = vector.shape_cast %244 : vector<64x128xf32> to vector<8x8x128xf32>
    %c0_85 = arith.constant 0 : index
    %c0_86 = arith.constant 0 : index
    %c0_87 = arith.constant 0 : index
    %246 = vector.load %arg12[%c0_85, %c0_86, %c0_87] : memref<8x8x128xf32, #tpu.memory_space<vmem>>, vector<8x8x128xf32>
    tpu.vector_store %arg12[%c0_85, %c0_86, %c0_87], %245 {strides = array<i32>} : memref<8x8x128xf32, #tpu.memory_space<vmem>>, vector<8x8x128xf32>,
    %c0_88 = arith.constant 0 : index
    %c0_89 = arith.constant 0 : index
    %247 = vector.load %arg6[%c0_88, %c0_89] : memref<32x128xbf16, #tpu.memory_space<vmem>>, vector<32x128xbf16>
    %cst_90 = arith.constant 0.000000e+00 : f32
    %248 = vector.broadcast %cst_90 : f32 to vector<8x32xf32>
    %cst_91 = arith.constant 0.000000e+00 : f32
    %249 = vector.broadcast %cst_91 : f32 to vector<8x32xf32>
    %c0_i32_92 = arith.constant 0 : i32
    %250 = arith.index_cast %c0_i32_92 : i32 to index
    %c0_93 = arith.constant 0 : index
    %c0_94 = arith.constant 0 : index
    %251 = vector.load %arg12[%250, %c0_93, %c0_94] : memref<8x8x128xf32, #tpu.memory_space<vmem>>, vector<1x8x128xf32>
    %252 = vector.shape_cast %251 : vector<1x8x128xf32> to vector<8x128xf32>
    %253 = arith.truncf %248 : vector<8x32xf32> to vector<8x32xbf16>
    %cst_95 = arith.constant dense<0.000000e+00> : vector<8x128xf32>
    %254 = tpu.matmul %253, %247, %cst_95 {dimension_numbers = #tpu.dot_dimension_numbers<[1], [0], [0], [1], [0, 0, 1, 1], [], []>} : vector<8x32xbf16>, vector<32x128xbf16>, vector<8x128xf32> -> vector<8x128xf32>
    %255 = arith.addf %252, %254 : vector<8x128xf32>
    %256 = arith.negf %255 : vector<8x128xf32>
    %257 = math.exp %256 : vector<8x128xf32>
    %cst_96 = arith.constant 1.000000e+00 : f32
    %258 = vector.broadcast %cst_96 : f32 to vector<8x128xf32>
    %259 = arith.addf %258, %257 : vector<8x128xf32>
    %260 = arith.divf %258, %259 : vector<8x128xf32>
    %261 = vector.extract_strided_slice %260 {offsets = [0, 0], sizes = [8, 32], strides = [1, 1]} : vector<8x128xf32> to vector<8x32xf32>
    %262 = vector.extract_strided_slice %260 {offsets = [0, 32], sizes = [8, 32], strides = [1, 1]} : vector<8x128xf32> to vector<8x32xf32>
    %263 = vector.extract_strided_slice %260 {offsets = [0, 64], sizes = [8, 32], strides = [1, 1]} : vector<8x128xf32> to vector<8x32xf32>
    %cst_97 = arith.constant 2.000000e+00 : f32
    %264 = vector.broadcast %cst_97 : f32 to vector<8x32xf32>
    %265 = arith.mulf %264, %263 : vector<8x32xf32>
    %cst_98 = arith.constant 1.000000e+00 : f32
    %266 = vector.broadcast %cst_98 : f32 to vector<8x32xf32>
    %267 = arith.subf %265, %266 : vector<8x32xf32>
    %268 = vector.extract_strided_slice %260 {offsets = [0, 96], sizes = [8, 32], strides = [1, 1]} : vector<8x128xf32> to vector<8x32xf32>
    %269 = arith.mulf %262, %249 : vector<8x32xf32>
    %270 = arith.mulf %261, %267 : vector<8x32xf32>
    %271 = arith.addf %269, %270 : vector<8x32xf32>
    %272 = math.tanh %271 : vector<8x32xf32>
    %273 = arith.mulf %268, %272 : vector<8x32xf32>
    %c1_i32_99 = arith.constant 1 : i32
    %274 = arith.index_cast %c1_i32_99 : i32 to index
    %c0_100 = arith.constant 0 : index
    %c0_101 = arith.constant 0 : index
    %275 = vector.load %arg12[%274, %c0_100, %c0_101] : memref<8x8x128xf32, #tpu.memory_space<vmem>>, vector<1x8x128xf32>
    %276 = vector.shape_cast %275 : vector<1x8x128xf32> to vector<8x128xf32>
    %277 = arith.truncf %273 : vector<8x32xf32> to vector<8x32xbf16>
    %cst_102 = arith.constant dense<0.000000e+00> : vector<8x128xf32>
    %278 = tpu.matmul %277, %247, %cst_102 {dimension_numbers = #tpu.dot_dimension_numbers<[1], [0], [0], [1], [0, 0, 1, 1], [], []>} : vector<8x32xbf16>, vector<32x128xbf16>, vector<8x128xf32> -> vector<8x128xf32>
    %279 = arith.addf %276, %278 : vector<8x128xf32>
    %280 = arith.negf %279 : vector<8x128xf32>
    %281 = math.exp %280 : vector<8x128xf32>
    %cst_103 = arith.constant 1.000000e+00 : f32
    %282 = vector.broadcast %cst_103 : f32 to vector<8x128xf32>
    %283 = arith.addf %282, %281 : vector<8x128xf32>
    %284 = arith.divf %282, %283 : vector<8x128xf32>
    %285 = vector.extract_strided_slice %284 {offsets = [0, 0], sizes = [8, 32], strides = [1, 1]} : vector<8x128xf32> to vector<8x32xf32>
    %286 = vector.extract_strided_slice %284 {offsets = [0, 32], sizes = [8, 32], strides = [1, 1]} : vector<8x128xf32> to vector<8x32xf32>
    %287 = vector.extract_strided_slice %284 {offsets = [0, 64], sizes = [8, 32], strides = [1, 1]} : vector<8x128xf32> to vector<8x32xf32>
    %cst_104 = arith.constant 2.000000e+00 : f32
    %288 = vector.broadcast %cst_104 : f32 to vector<8x32xf32>
    %289 = arith.mulf %288, %287 : vector<8x32xf32>
    %cst_105 = arith.constant 1.000000e+00 : f32
    %290 = vector.broadcast %cst_105 : f32 to vector<8x32xf32>
    %291 = arith.subf %289, %290 : vector<8x32xf32>
    %292 = vector.extract_strided_slice %284 {offsets = [0, 96], sizes = [8, 32], strides = [1, 1]} : vector<8x128xf32> to vector<8x32xf32>
    %293 = arith.mulf %286, %271 : vector<8x32xf32>
    %294 = arith.mulf %285, %291 : vector<8x32xf32>
    %295 = arith.addf %293, %294 : vector<8x32xf32>
    %296 = math.tanh %295 : vector<8x32xf32>
    %297 = arith.mulf %292, %296 : vector<8x32xf32>
    %c2_i32_106 = arith.constant 2 : i32
    %298 = arith.index_cast %c2_i32_106 : i32 to index
    %c0_107 = arith.constant 0 : index
    %c0_108 = arith.constant 0 : index
    %299 = vector.load %arg12[%298, %c0_107, %c0_108] : memref<8x8x128xf32, #tpu.memory_space<vmem>>, vector<1x8x128xf32>
    %300 = vector.shape_cast %299 : vector<1x8x128xf32> to vector<8x128xf32>
    %301 = arith.truncf %297 : vector<8x32xf32> to vector<8x32xbf16>
    %cst_109 = arith.constant dense<0.000000e+00> : vector<8x128xf32>
    %302 = tpu.matmul %301, %247, %cst_109 {dimension_numbers = #tpu.dot_dimension_numbers<[1], [0], [0], [1], [0, 0, 1, 1], [], []>} : vector<8x32xbf16>, vector<32x128xbf16>, vector<8x128xf32> -> vector<8x128xf32>
    %303 = arith.addf %300, %302 : vector<8x128xf32>
    %304 = arith.negf %303 : vector<8x128xf32>
    %305 = math.exp %304 : vector<8x128xf32>
    %cst_110 = arith.constant 1.000000e+00 : f32
    %306 = vector.broadcast %cst_110 : f32 to vector<8x128xf32>
    %307 = arith.addf %306, %305 : vector<8x128xf32>
    %308 = arith.divf %306, %307 : vector<8x128xf32>
    %309 = vector.extract_strided_slice %308 {offsets = [0, 0], sizes = [8, 32], strides = [1, 1]} : vector<8x128xf32> to vector<8x32xf32>
    %310 = vector.extract_strided_slice %308 {offsets = [0, 32], sizes = [8, 32], strides = [1, 1]} : vector<8x128xf32> to vector<8x32xf32>
    %311 = vector.extract_strided_slice %308 {offsets = [0, 64], sizes = [8, 32], strides = [1, 1]} : vector<8x128xf32> to vector<8x32xf32>
    %cst_111 = arith.constant 2.000000e+00 : f32
    %312 = vector.broadcast %cst_111 : f32 to vector<8x32xf32>
    %313 = arith.mulf %312, %311 : vector<8x32xf32>
    %cst_112 = arith.constant 1.000000e+00 : f32
    %314 = vector.broadcast %cst_112 : f32 to vector<8x32xf32>
    %315 = arith.subf %313, %314 : vector<8x32xf32>
    %316 = vector.extract_strided_slice %308 {offsets = [0, 96], sizes = [8, 32], strides = [1, 1]} : vector<8x128xf32> to vector<8x32xf32>
    %317 = arith.mulf %310, %295 : vector<8x32xf32>
    %318 = arith.mulf %309, %315 : vector<8x32xf32>
    %319 = arith.addf %317, %318 : vector<8x32xf32>
    %320 = math.tanh %319 : vector<8x32xf32>
    %321 = arith.mulf %316, %320 : vector<8x32xf32>
    %c3_i32_113 = arith.constant 3 : i32
    %322 = arith.index_cast %c3_i32_113 : i32 to index
    %c0_114 = arith.constant 0 : index
    %c0_115 = arith.constant 0 : index
    %323 = vector.load %arg12[%322, %c0_114, %c0_115] : memref<8x8x128xf32, #tpu.memory_space<vmem>>, vector<1x8x128xf32>
    %324 = vector.shape_cast %323 : vector<1x8x128xf32> to vector<8x128xf32>
    %325 = arith.truncf %321 : vector<8x32xf32> to vector<8x32xbf16>
    %cst_116 = arith.constant dense<0.000000e+00> : vector<8x128xf32>
    %326 = tpu.matmul %325, %247, %cst_116 {dimension_numbers = #tpu.dot_dimension_numbers<[1], [0], [0], [1], [0, 0, 1, 1], [], []>} : vector<8x32xbf16>, vector<32x128xbf16>, vector<8x128xf32> -> vector<8x128xf32>
    %327 = arith.addf %324, %326 : vector<8x128xf32>
    %328 = arith.negf %327 : vector<8x128xf32>
    %329 = math.exp %328 : vector<8x128xf32>
    %cst_117 = arith.constant 1.000000e+00 : f32
    %330 = vector.broadcast %cst_117 : f32 to vector<8x128xf32>
    %331 = arith.addf %330, %329 : vector<8x128xf32>
    %332 = arith.divf %330, %331 : vector<8x128xf32>
    %333 = vector.extract_strided_slice %332 {offsets = [0, 0], sizes = [8, 32], strides = [1, 1]} : vector<8x128xf32> to vector<8x32xf32>
    %334 = vector.extract_strided_slice %332 {offsets = [0, 32], sizes = [8, 32], strides = [1, 1]} : vector<8x128xf32> to vector<8x32xf32>
    %335 = vector.extract_strided_slice %332 {offsets = [0, 64], sizes = [8, 32], strides = [1, 1]} : vector<8x128xf32> to vector<8x32xf32>
    %cst_118 = arith.constant 2.000000e+00 : f32
    %336 = vector.broadcast %cst_118 : f32 to vector<8x32xf32>
    %337 = arith.mulf %336, %335 : vector<8x32xf32>
    %cst_119 = arith.constant 1.000000e+00 : f32
    %338 = vector.broadcast %cst_119 : f32 to vector<8x32xf32>
    %339 = arith.subf %337, %338 : vector<8x32xf32>
    %340 = vector.extract_strided_slice %332 {offsets = [0, 96], sizes = [8, 32], strides = [1, 1]} : vector<8x128xf32> to vector<8x32xf32>
    %341 = arith.mulf %334, %319 : vector<8x32xf32>
    %342 = arith.mulf %333, %339 : vector<8x32xf32>
    %343 = arith.addf %341, %342 : vector<8x32xf32>
    %344 = math.tanh %343 : vector<8x32xf32>
    %345 = arith.mulf %340, %344 : vector<8x32xf32>
    %c4_i32_120 = arith.constant 4 : i32
    %346 = arith.index_cast %c4_i32_120 : i32 to index
    %c0_121 = arith.constant 0 : index
    %c0_122 = arith.constant 0 : index
    %347 = vector.load %arg12[%346, %c0_121, %c0_122] : memref<8x8x128xf32, #tpu.memory_space<vmem>>, vector<1x8x128xf32>
    %348 = vector.shape_cast %347 : vector<1x8x128xf32> to vector<8x128xf32>
    %349 = arith.truncf %345 : vector<8x32xf32> to vector<8x32xbf16>
    %cst_123 = arith.constant dense<0.000000e+00> : vector<8x128xf32>
    %350 = tpu.matmul %349, %247, %cst_123 {dimension_numbers = #tpu.dot_dimension_numbers<[1], [0], [0], [1], [0, 0, 1, 1], [], []>} : vector<8x32xbf16>, vector<32x128xbf16>, vector<8x128xf32> -> vector<8x128xf32>
    %351 = arith.addf %348, %350 : vector<8x128xf32>
    %352 = arith.negf %351 : vector<8x128xf32>
    %353 = math.exp %352 : vector<8x128xf32>
    %cst_124 = arith.constant 1.000000e+00 : f32
    %354 = vector.broadcast %cst_124 : f32 to vector<8x128xf32>
    %355 = arith.addf %354, %353 : vector<8x128xf32>
    %356 = arith.divf %354, %355 : vector<8x128xf32>
    %357 = vector.extract_strided_slice %356 {offsets = [0, 0], sizes = [8, 32], strides = [1, 1]} : vector<8x128xf32> to vector<8x32xf32>
    %358 = vector.extract_strided_slice %356 {offsets = [0, 32], sizes = [8, 32], strides = [1, 1]} : vector<8x128xf32> to vector<8x32xf32>
    %359 = vector.extract_strided_slice %356 {offsets = [0, 64], sizes = [8, 32], strides = [1, 1]} : vector<8x128xf32> to vector<8x32xf32>
    %cst_125 = arith.constant 2.000000e+00 : f32
    %360 = vector.broadcast %cst_125 : f32 to vector<8x32xf32>
    %361 = arith.mulf %360, %359 : vector<8x32xf32>
    %cst_126 = arith.constant 1.000000e+00 : f32
    %362 = vector.broadcast %cst_126 : f32 to vector<8x32xf32>
    %363 = arith.subf %361, %362 : vector<8x32xf32>
    %364 = vector.extract_strided_slice %356 {offsets = [0, 96], sizes = [8, 32], strides = [1, 1]} : vector<8x128xf32> to vector<8x32xf32>
    %365 = arith.mulf %358, %343 : vector<8x32xf32>
    %366 = arith.mulf %357, %363 : vector<8x32xf32>
    %367 = arith.addf %365, %366 : vector<8x32xf32>
    %368 = math.tanh %367 : vector<8x32xf32>
    %369 = arith.mulf %364, %368 : vector<8x32xf32>
    %c5_i32_127 = arith.constant 5 : i32
    %370 = arith.index_cast %c5_i32_127 : i32 to index
    %c0_128 = arith.constant 0 : index
    %c0_129 = arith.constant 0 : index
    %371 = vector.load %arg12[%370, %c0_128, %c0_129] : memref<8x8x128xf32, #tpu.memory_space<vmem>>, vector<1x8x128xf32>
    %372 = vector.shape_cast %371 : vector<1x8x128xf32> to vector<8x128xf32>
    %373 = arith.truncf %369 : vector<8x32xf32> to vector<8x32xbf16>
    %cst_130 = arith.constant dense<0.000000e+00> : vector<8x128xf32>
    %374 = tpu.matmul %373, %247, %cst_130 {dimension_numbers = #tpu.dot_dimension_numbers<[1], [0], [0], [1], [0, 0, 1, 1], [], []>} : vector<8x32xbf16>, vector<32x128xbf16>, vector<8x128xf32> -> vector<8x128xf32>
    %375 = arith.addf %372, %374 : vector<8x128xf32>
    %376 = arith.negf %375 : vector<8x128xf32>
    %377 = math.exp %376 : vector<8x128xf32>
    %cst_131 = arith.constant 1.000000e+00 : f32
    %378 = vector.broadcast %cst_131 : f32 to vector<8x128xf32>
    %379 = arith.addf %378, %377 : vector<8x128xf32>
    %380 = arith.divf %378, %379 : vector<8x128xf32>
    %381 = vector.extract_strided_slice %380 {offsets = [0, 0], sizes = [8, 32], strides = [1, 1]} : vector<8x128xf32> to vector<8x32xf32>
    %382 = vector.extract_strided_slice %380 {offsets = [0, 32], sizes = [8, 32], strides = [1, 1]} : vector<8x128xf32> to vector<8x32xf32>
    %383 = vector.extract_strided_slice %380 {offsets = [0, 64], sizes = [8, 32], strides = [1, 1]} : vector<8x128xf32> to vector<8x32xf32>
    %cst_132 = arith.constant 2.000000e+00 : f32
    %384 = vector.broadcast %cst_132 : f32 to vector<8x32xf32>
    %385 = arith.mulf %384, %383 : vector<8x32xf32>
    %cst_133 = arith.constant 1.000000e+00 : f32
    %386 = vector.broadcast %cst_133 : f32 to vector<8x32xf32>
    %387 = arith.subf %385, %386 : vector<8x32xf32>
    %388 = vector.extract_strided_slice %380 {offsets = [0, 96], sizes = [8, 32], strides = [1, 1]} : vector<8x128xf32> to vector<8x32xf32>
    %389 = arith.mulf %382, %367 : vector<8x32xf32>
    %390 = arith.mulf %381, %387 : vector<8x32xf32>
    %391 = arith.addf %389, %390 : vector<8x32xf32>
    %392 = math.tanh %391 : vector<8x32xf32>
    %393 = arith.mulf %388, %392 : vector<8x32xf32>
    %c6_i32_134 = arith.constant 6 : i32
    %394 = arith.index_cast %c6_i32_134 : i32 to index
    %c0_135 = arith.constant 0 : index
    %c0_136 = arith.constant 0 : index
    %395 = vector.load %arg12[%394, %c0_135, %c0_136] : memref<8x8x128xf32, #tpu.memory_space<vmem>>, vector<1x8x128xf32>
    %396 = vector.shape_cast %395 : vector<1x8x128xf32> to vector<8x128xf32>
    %397 = arith.truncf %393 : vector<8x32xf32> to vector<8x32xbf16>
    %cst_137 = arith.constant dense<0.000000e+00> : vector<8x128xf32>
    %398 = tpu.matmul %397, %247, %cst_137 {dimension_numbers = #tpu.dot_dimension_numbers<[1], [0], [0], [1], [0, 0, 1, 1], [], []>} : vector<8x32xbf16>, vector<32x128xbf16>, vector<8x128xf32> -> vector<8x128xf32>
    %399 = arith.addf %396, %398 : vector<8x128xf32>
    %400 = arith.negf %399 : vector<8x128xf32>
    %401 = math.exp %400 : vector<8x128xf32>
    %cst_138 = arith.constant 1.000000e+00 : f32
    %402 = vector.broadcast %cst_138 : f32 to vector<8x128xf32>
    %403 = arith.addf %402, %401 : vector<8x128xf32>
    %404 = arith.divf %402, %403 : vector<8x128xf32>
    %405 = vector.extract_strided_slice %404 {offsets = [0, 0], sizes = [8, 32], strides = [1, 1]} : vector<8x128xf32> to vector<8x32xf32>
    %406 = vector.extract_strided_slice %404 {offsets = [0, 32], sizes = [8, 32], strides = [1, 1]} : vector<8x128xf32> to vector<8x32xf32>
    %407 = vector.extract_strided_slice %404 {offsets = [0, 64], sizes = [8, 32], strides = [1, 1]} : vector<8x128xf32> to vector<8x32xf32>
    %cst_139 = arith.constant 2.000000e+00 : f32
    %408 = vector.broadcast %cst_139 : f32 to vector<8x32xf32>
    %409 = arith.mulf %408, %407 : vector<8x32xf32>
    %cst_140 = arith.constant 1.000000e+00 : f32
    %410 = vector.broadcast %cst_140 : f32 to vector<8x32xf32>
    %411 = arith.subf %409, %410 : vector<8x32xf32>
    %412 = vector.extract_strided_slice %404 {offsets = [0, 96], sizes = [8, 32], strides = [1, 1]} : vector<8x128xf32> to vector<8x32xf32>
    %413 = arith.mulf %406, %391 : vector<8x32xf32>
    %414 = arith.mulf %405, %411 : vector<8x32xf32>
    %415 = arith.addf %413, %414 : vector<8x32xf32>
    %416 = math.tanh %415 : vector<8x32xf32>
    %417 = arith.mulf %412, %416 : vector<8x32xf32>
    %c7_i32_141 = arith.constant 7 : i32
    %418 = arith.index_cast %c7_i32_141 : i32 to index
    %c0_142 = arith.constant 0 : index
    %c0_143 = arith.constant 0 : index
    %419 = vector.load %arg12[%418, %c0_142, %c0_143] : memref<8x8x128xf32, #tpu.memory_space<vmem>>, vector<1x8x128xf32>
    %420 = vector.shape_cast %419 : vector<1x8x128xf32> to vector<8x128xf32>
    %421 = arith.truncf %417 : vector<8x32xf32> to vector<8x32xbf16>
    %cst_144 = arith.constant dense<0.000000e+00> : vector<8x128xf32>
    %422 = tpu.matmul %421, %247, %cst_144 {dimension_numbers = #tpu.dot_dimension_numbers<[1], [0], [0], [1], [0, 0, 1, 1], [], []>} : vector<8x32xbf16>, vector<32x128xbf16>, vector<8x128xf32> -> vector<8x128xf32>
    %423 = arith.addf %420, %422 : vector<8x128xf32>
    %424 = arith.negf %423 : vector<8x128xf32>
    %425 = math.exp %424 : vector<8x128xf32>
    %cst_145 = arith.constant 1.000000e+00 : f32
    %426 = vector.broadcast %cst_145 : f32 to vector<8x128xf32>
    %427 = arith.addf %426, %425 : vector<8x128xf32>
    %428 = arith.divf %426, %427 : vector<8x128xf32>
    %429 = vector.extract_strided_slice %428 {offsets = [0, 0], sizes = [8, 32], strides = [1, 1]} : vector<8x128xf32> to vector<8x32xf32>
    %430 = vector.extract_strided_slice %428 {offsets = [0, 32], sizes = [8, 32], strides = [1, 1]} : vector<8x128xf32> to vector<8x32xf32>
    %431 = vector.extract_strided_slice %428 {offsets = [0, 64], sizes = [8, 32], strides = [1, 1]} : vector<8x128xf32> to vector<8x32xf32>
    %cst_146 = arith.constant 2.000000e+00 : f32
    %432 = vector.broadcast %cst_146 : f32 to vector<8x32xf32>
    %433 = arith.mulf %432, %431 : vector<8x32xf32>
    %cst_147 = arith.constant 1.000000e+00 : f32
    %434 = vector.broadcast %cst_147 : f32 to vector<8x32xf32>
    %435 = arith.subf %433, %434 : vector<8x32xf32>
    %436 = vector.extract_strided_slice %428 {offsets = [0, 96], sizes = [8, 32], strides = [1, 1]} : vector<8x128xf32> to vector<8x32xf32>
    %437 = arith.mulf %430, %415 : vector<8x32xf32>
    %438 = arith.mulf %429, %435 : vector<8x32xf32>
    %439 = arith.addf %437, %438 : vector<8x32xf32>
    %440 = math.tanh %439 : vector<8x32xf32>
    %441 = arith.mulf %436, %440 : vector<8x32xf32>
    %c8_i32_148 = arith.constant 8 : i32
    %c0_149 = arith.constant 0 : index
    %c0_150 = arith.constant 0 : index
    %442 = vector.load %arg8[%c0_149, %c0_150] : memref<32x128xf32, #tpu.memory_space<vmem>>, vector<32x128xf32>
    %cst_151 = arith.constant dense<0.000000e+00> : vector<8x128xf32>
    %443 = tpu.matmul %441, %442, %cst_151 {dimension_numbers = #tpu.dot_dimension_numbers<[1], [0], [0], [1], [0, 0, 1, 1], [], []>} : vector<8x32xf32>, vector<32x128xf32>, vector<8x128xf32> -> vector<8x128xf32>
    %c0_152 = arith.constant 0 : index
    %c0_153 = arith.constant 0 : index
    %444 = vector.load %arg9[%c0_152, %c0_153] : memref<1x128xf32, #tpu.memory_space<vmem>>, vector<1x128xf32>
    %445 = vector.broadcast %444 : vector<1x128xf32> to vector<8x128xf32>
    %446 = arith.addf %443, %445 : vector<8x128xf32>
    %c0_154 = arith.constant 0 : index
    %c0_155 = arith.constant 0 : index
    %447 = vector.load %arg10[%c0_154, %c0_155] : memref<8x128xf32, #tpu.memory_space<vmem>>, vector<8x128xf32>
    tpu.vector_store %arg10[%c0_154, %c0_155], %446 {strides = array<i32>} : memref<8x128xf32, #tpu.memory_space<vmem>>, vector<8x128xf32>,
    return
  }
  func.func @transform_0(%arg0: i32) -> (i32, i32, i32) {
    %c0_i32 = arith.constant 0 : i32
    %c0_i32_0 = arith.constant 0 : i32
    %c0_i32_1 = arith.constant 0 : i32
    %c0_i32_2 = arith.constant 0 : i32
    return %c0_i32, %c0_i32_0, %c0_i32_1 : i32, i32, i32
  }
  func.func @transform_1(%arg0: i32) -> (i32, i32) {
    %c0_i32 = arith.constant 0 : i32
    %c0_i32_0 = arith.constant 0 : i32
    %c0_i32_1 = arith.constant 0 : i32
    return %c0_i32, %c0_i32_0 : i32, i32
  }
  func.func @transform_2(%arg0: i32) -> (i32, i32) {
    %c0_i32 = arith.constant 0 : i32
    %c0_i32_0 = arith.constant 0 : i32
    %c0_i32_1 = arith.constant 0 : i32
    return %c0_i32, %c0_i32_0 : i32, i32
  }
  func.func @transform_3(%arg0: i32) -> (i32, i32) {
    %c0_i32 = arith.constant 0 : i32
    %c0_i32_0 = arith.constant 0 : i32
    %c0_i32_1 = arith.constant 0 : i32
    return %c0_i32, %c0_i32_0 : i32, i32
  }
  func.func @transform_4(%arg0: i32) -> (i32, i32) {
    %c0_i32 = arith.constant 0 : i32
    %c0_i32_0 = arith.constant 0 : i32
    %c0_i32_1 = arith.constant 0 : i32
    return %c0_i32, %c0_i32_0 : i32, i32
  }
  func.func @transform_5(%arg0: i32) -> (i32, i32) {
    %c0_i32 = arith.constant 0 : i32
    %c0_i32_0 = arith.constant 0 : i32
    %c0_i32_1 = arith.constant 0 : i32
    return %c0_i32, %c0_i32_0 : i32, i32
  }
  func.func @transform_6(%arg0: i32) -> (i32, i32) {
    %c0_i32 = arith.constant 0 : i32
    %c0_i32_0 = arith.constant 0 : i32
    %c0_i32_1 = arith.constant 0 : i32
    return %c0_i32, %c0_i32_0 : i32, i32
  }
  func.func @transform_7(%arg0: i32) -> (i32, i32) {
    %c0_i32 = arith.constant 0 : i32
    %c0_i32_0 = arith.constant 0 : i32
    %c0_i32_1 = arith.constant 0 : i32
    return %c0_i32, %c0_i32_0 : i32, i32
  }
  func.func @transform_8(%arg0: i32) -> (i32, i32) {
    %c0_i32 = arith.constant 0 : i32
    %c0_i32_0 = arith.constant 0 : i32
    %c0_i32_1 = arith.constant 0 : i32
    return %c0_i32, %c0_i32_0 : i32, i32
  }
  func.func @transform_9(%arg0: i32) -> (i32, i32) {
    %c0_i32 = arith.constant 0 : i32
    %c0_i32_0 = arith.constant 0 : i32
    %c0_i32_1 = arith.constant 0 : i32
    return %c0_i32, %c0_i32_0 : i32, i32
  }
}

</mosaic_0001>

<llo_original>
// kernel: my_lstm_forward.1
$region0: #{my_lstm_forward.1}
  #allocation0 [shape = 'u32[]', space=smem, size = 0x4, offset = 0x4, fixed_abs, tag = 'smem constant byte address 0x4 - core index']
  #allocation1 [shape = 'u32[72,128]{1,0:T(1,128)}', space=vmem, size = 0x9000, scoped, tag = 'internal scratch']
  #allocation2 [shape = 'f32[8,8,32]{2,1,0:T(8,128)}', space=vmem, size = 0x8000, scoped, tag = 'scratch operand']
  #allocation3 [shape = 'f32[8,8,128]{2,1,0:T(8,128)}', space=vmem, size = 0x8000, scoped, tag = 'scratch operand']
  %s0 = inlined_call_operand.vmem [shape: f32[8,8,16], index: 0, kind: input, shape index: {}]
  %s1 = inlined_call_operand.vmem [shape: bf16[16,128], index: 1, kind: input, shape index: {}]
  %s2 = inlined_call_operand.vmem [shape: bf16[32,128], index: 2, kind: input, shape index: {}]
  %s3 = inlined_call_operand.vmem [shape: f32[1,128], index: 3, kind: input, shape index: {}]
  %s4 = inlined_call_operand.vmem [shape: bf16[32,128], index: 4, kind: input, shape index: {}]
  %s5 = inlined_call_operand.vmem [shape: bf16[32,128], index: 5, kind: input, shape index: {}]
  %s6 = inlined_call_operand.vmem [shape: f32[1,128], index: 6, kind: input, shape index: {}]
  %s7 = inlined_call_operand.vmem [shape: f32[32,128], index: 7, kind: input, shape index: {}]
  %s8 = inlined_call_operand.vmem [shape: f32[1,128], index: 8, kind: input, shape index: {}]
  %s9 = inlined_call_operand.vmem [shape: f32[8,128], index: 9, kind: output, shape index: {}]
  %s10 = sld [smem:[#allocation0]]
  $region46: #{my_lstm_forward.1} parent=0
    _
  %s12 = ssub.s32 1, %s10
  %s13 = scalar_select 0, %s12, %s10
  // Predicated region
  $region2: #{my_lstm_forward.1} parent=0 // pred_check
    _
  $region3: #{my_lstm_forward.1} parent=0 // pred_check_branch
    %15 = sbr.rel (0) target = $region5
  $region4: #{my_lstm_forward.1} parent=0 // pred_region
    _
  $region5: #{my_lstm_forward.1} parent=0 // pred_fallthru
    _
  // Predicated region
  $region6: #{my_lstm_forward.1} parent=0 // pred_check
    _
  $region7: #{my_lstm_forward.1} parent=0 // pred_check_branch
    %17 = sbr.rel (0) target = $region9
  $region8: #{my_lstm_forward.1} parent=0 // pred_region
    _
  $region9: #{my_lstm_forward.1} parent=0 // pred_fallthru
    _
  // Predicated region
  $region10: #{my_lstm_forward.1} parent=0 // pred_check
    _
  $region11: #{my_lstm_forward.1} parent=0 // pred_check_branch
    %19 = sbr.rel (0) target = $region13
  $region12: #{my_lstm_forward.1} parent=0 // pred_region
    _
  $region13: #{my_lstm_forward.1} parent=0 // pred_fallthru
    _
  // Predicated region
  $region14: #{my_lstm_forward.1} parent=0 // pred_check
    _
  $region15: #{my_lstm_forward.1} parent=0 // pred_check_branch
    %21 = sbr.rel (0) target = $region17
  $region16: #{my_lstm_forward.1} parent=0 // pred_region
    _
  $region17: #{my_lstm_forward.1} parent=0 // pred_fallthru
    _
  // Predicated region
  $region18: #{my_lstm_forward.1} parent=0 // pred_check
    _
  $region19: #{my_lstm_forward.1} parent=0 // pred_check_branch
    %23 = sbr.rel (0) target = $region21
  $region20: #{my_lstm_forward.1} parent=0 // pred_region
    _
  $region21: #{my_lstm_forward.1} parent=0 // pred_fallthru
    _
  // Predicated region
  $region22: #{my_lstm_forward.1} parent=0 // pred_check
    _
  $region23: #{my_lstm_forward.1} parent=0 // pred_check_branch
    %25 = sbr.rel (0) target = $region25
  $region24: #{my_lstm_forward.1} parent=0 // pred_region
    _
  $region25: #{my_lstm_forward.1} parent=0 // pred_fallthru
    _
  // Predicated region
  $region26: #{my_lstm_forward.1} parent=0 // pred_check
    _
  $region27: #{my_lstm_forward.1} parent=0 // pred_check_branch
    %27 = sbr.rel (0) target = $region29
  $region28: #{my_lstm_forward.1} parent=0 // pred_region
    _
  $region29: #{my_lstm_forward.1} parent=0 // pred_fallthru
    _
  // Predicated region
  $region30: #{my_lstm_forward.1} parent=0 // pred_check
    _
  $region31: #{my_lstm_forward.1} parent=0 // pred_check_branch
    %29 = sbr.rel (0) target = $region33
  $region32: #{my_lstm_forward.1} parent=0 // pred_region
    _
  $region33: #{my_lstm_forward.1} parent=0 // pred_fallthru
    _
  // Predicated region
  $region34: #{my_lstm_forward.1} parent=0 // pred_check
    _
  $region35: #{my_lstm_forward.1} parent=0 // pred_check_branch
    %31 = sbr.rel (0) target = $region37
  $region36: #{my_lstm_forward.1} parent=0 // pred_region
    _
  $region37: #{my_lstm_forward.1} parent=0 // pred_fallthru
    _
  %v33 = vld [vmem:[%s0] sm:$0xff]
  %v34 = vld [vmem:[%s0 + $0x8] sm:$0xff]
  %v35 = vld [vmem:[%s0 + $0x10] sm:$0xff]
  %v36 = vld [vmem:[%s0 + $0x18] sm:$0xff]
  %v37 = vld [vmem:[%s0 + $0x20] sm:$0xff]
  %v38 = vld [vmem:[%s0 + $0x28] sm:$0xff]
  %v39 = vld [vmem:[%s0 + $0x30] sm:$0xff]
  %v40 = vld [vmem:[%s0 + $0x38] sm:$0xff]
  %v41 = vpack.c.bf16 %v34, %v33
  %v42 = vpack.c.bf16 %v36, %v35
  %v43 = vpack.c.bf16 %v38, %v37
  %v44 = vpack.c.bf16 %v40, %v39
  %v45 = vld [vmem:[%s1] sm:$0xf]
  %v46 = vld [vmem:[%s1 + $0x4] sm:$0xf]
  %v47 = vld [vmem:[%s3] sm:$0x1]
  %v49 = vperm.slane %v47, 0
  %v53 = vunpack.c.l.b16 %v45
  %v54 = vunpack.c.l.b16 %v46
  %v55 = vpack.c.b16 %v54, %v53
  %vm57 = vcmask 130048
  %v59 = vsel %vm57, %v41, 0
  %v62 = vsel %vm57, %v42, 0
  %v65 = vsel %vm57, %v43, 0
  %v68 = vsel %vm57, %v44, 0
  %70 = vmatpush.bf16.msra.mxu0 0
  %71 = vmatpush.bf16.msra.mxu0 0
  %72 = vmatpush.bf16.msra.mxu0 0
  %73 = vmatpush.bf16.msra.mxu0 0
  %74 = vmatpush.bf16.msra.mxu0 0
  %75 = vmatpush.bf16.msra.mxu0 0
  %76 = vmatpush.bf16.msra.mxu0 0
  %77 = vmatpush.bf16.msra.mxu0 %v55
  %78 = vmatmul.bf16.gmra.mxu0 %v59
  %v79 = vpop.f32.mrf.mxu0
  %v80 = vadd.f32 %v49, %v79
  %v81 = vpop.f32.mrf.mxu0
  %v82 = vadd.f32 %v49, %v81
  %83 = vmatmul.bf16.gmra.mxu0 %v62
  %v84 = vpop.f32.mrf.mxu0
  %v85 = vadd.f32 %v49, %v84
  %v86 = vpop.f32.mrf.mxu0
  %v87 = vadd.f32 %v49, %v86
  %88 = vmatmul.bf16.gmra.mxu0 %v65
  %v89 = vpop.f32.mrf.mxu0
  %v90 = vadd.f32 %v49, %v89
  %v91 = vpop.f32.mrf.mxu0
  %v92 = vadd.f32 %v49, %v91
  %93 = vmatmul.bf16.gmra.mxu0 %v68
  %v94 = vpop.f32.mrf.mxu0
  %v95 = vadd.f32 %v49, %v94
  %v96 = vpop.f32.mrf.mxu0
  %v97 = vadd.f32 %v49, %v96
  %98 = vdwg.mxu0
  %99 = vst [vmem:[#allocation3] sm:$0xff] %v80
  %100 = vst [vmem:[#allocation3 + $0x8] sm:$0xff] %v82
  %101 = vst [vmem:[#allocation3 + $0x10] sm:$0xff] %v85
  %102 = vst [vmem:[#allocation3 + $0x18] sm:$0xff] %v87
  %103 = vst [vmem:[#allocation3 + $0x20] sm:$0xff] %v90
  %104 = vst [vmem:[#allocation3 + $0x28] sm:$0xff] %v92
  %105 = vst [vmem:[#allocation3 + $0x30] sm:$0xff] %v95
  %106 = vst [vmem:[#allocation3 + $0x38] sm:$0xff] %v97
  %v107 = vld [vmem:[%s2] sm:$0xf]
  %v108 = vld [vmem:[%s2 + $0x4] sm:$0xf]
  %v109 = vld [vmem:[%s2 + $0x8] sm:$0xf]
  %v110 = vld [vmem:[%s2 + $0xc] sm:$0xf]
  %v111 = vld [vmem:[#allocation3] sm:$0xff]
  %v116 = vunpack.c.l.b16 %v107
  %v117 = vunpack.c.l.b16 %v108
  %v118 = vunpack.c.l.b16 %v109
  %v119 = vunpack.c.l.b16 %v110
  %v120 = vpack.c.b16 %v117, %v116
  %v121 = vpack.c.b16 %v119, %v118
  %vm124 = vcmask 261120
  %v126 = vsel %vm124, 0, 0
  %128 = vmatpush.bf16.msra.mxu0 0
  %129 = vmatpush.bf16.msra.mxu0 0
  %130 = vmatpush.bf16.msra.mxu0 0
  %131 = vmatpush.bf16.msra.mxu0 0
  %132 = vmatpush.bf16.msra.mxu0 0
  %133 = vmatpush.bf16.msra.mxu0 0
  %134 = vmatpush.bf16.msra.mxu0 %v121
  %135 = vmatpush.bf16.msra.mxu0 %v120
  %136 = vmatmul.bf16.gmra.mxu0 %v126
  %v137 = vpop.f32.mrf.mxu0
  %v138 = vadd.f32 0.0, %v137
  %v139 = vpop.f32.mrf.mxu0
  %140 = vdwg.mxu0
  %v141 = vadd.f32 %v111, %v138
  %v142 = vxor.u32 %v141, 2147483648
  %v143 = vmul.f32 %v142, 1.442695
  %v144 = vpow.pop %v143
  %v145 = vadd.f32 %v144, 1.0
  %v146 = vrcp.pop %v145
  %v147 = vmul.f32 %v145, %v146
  %v148 = vsub.f32 1.0, %v147
  %v149 = vmul.f32 %v146, %v148
  %v150 = vadd.f32 %v146, %v149
  %vm151 = vweird.f32 %v145
  %vm152 = vweird.f32 %v146
  %vm153 = vmor %vm151, %vm152
  %v154 = vsel %vm153, %v146, %v150
  %v155 = vand.u32 2147483647, %v145
  %vm156 = vcmp.eq.f32.partialorder %v155, 8.507059e+37
  %v157 = vand.u32 %v145, 2147483648
  %v158 = vor.u32 1.1754944e-38, %v157
  %v159 = vsel %vm156, %v158, %v154
  %v160 = vmul.f32 1.0, %v159
  %v161 = vmul.f32 %v160, 2.0
  %v162 = vsub.f32 %v161, 1.0
  %v163 = vmul.f32 %v160, 0.0
  %165 = vrot.lane.b32.xlu0 %v162, 64
  %v166 = vpop.permute.xlu0 %165
  %v168 = vmul.f32 %v160, %v166
  %170 = vrot.lane.b32.xlu0 %v168, 32
  %v171 = vpop.permute.xlu0 %170
  %v173 = vadd.f32 %v163, %v171
  %v174 = vtanh.pop %v173
  %176 = vrot.lane.b32.xlu0 %v174, 64
  %v177 = vpop.permute.xlu0 %176
  %v179 = vmul.f32 %v160, %v177
  %181 = vrot.lane.b32.xlu0 %v179, 32
  %v182 = vpop.permute.xlu0 %181
  %184 = vst.msk [vmem:[#allocation2] sm:$0xff] %vm124, %v182
  %s185 = scalar_lea.vmem [#allocation3], 8
  %v186 = vld [vmem:[%s185] sm:$0xff]
  %v187 = vpack.c.bf16 %v179, %v179
  %189 = vrot.lane.b32.xlu0 %v187, 32
  %v190 = vpop.permute.xlu0 %189
  %v192 = vsel %vm124, %v190, 0
  %194 = vmatpush.bf16.msra.mxu0 0
  %195 = vmatpush.bf16.msra.mxu0 0
  %196 = vmatpush.bf16.msra.mxu0 0
  %197 = vmatpush.bf16.msra.mxu0 0
  %198 = vmatpush.bf16.msra.mxu0 0
  %199 = vmatpush.bf16.msra.mxu0 0
  %200 = vmatpush.bf16.msra.mxu0 %v121
  %201 = vmatpush.bf16.msra.mxu0 %v120
  %202 = vmatmul.bf16.gmra.mxu0 %v192
  %v203 = vpop.f32.mrf.mxu0
  %v204 = vadd.f32 0.0, %v203
  %v205 = vpop.f32.mrf.mxu0
  %206 = vdwg.mxu0
  %v207 = vadd.f32 %v186, %v204
  %v208 = vxor.u32 %v207, 2147483648
  %v209 = vmul.f32 %v208, 1.442695
  %v210 = vpow.pop %v209
  %v211 = vadd.f32 %v210, 1.0
  %v212 = vrcp.pop %v211
  %v213 = vmul.f32 %v211, %v212
  %v214 = vsub.f32 1.0, %v213
  %v215 = vmul.f32 %v212, %v214
  %v216 = vadd.f32 %v212, %v215
  %vm217 = vweird.f32 %v211
  %vm218 = vweird.f32 %v212
  %vm219 = vmor %vm217, %vm218
  %v220 = vsel %vm219, %v212, %v216
  %v221 = vand.u32 2147483647, %v211
  %vm222 = vcmp.eq.f32.partialorder %v221, 8.507059e+37
  %v223 = vand.u32 %v211, 2147483648
  %v224 = vor.u32 1.1754944e-38, %v223
  %v225 = vsel %vm222, %v224, %v220
  %v226 = vmul.f32 1.0, %v225
  %v227 = vmul.f32 %v226, 2.0
  %v228 = vsub.f32 %v227, 1.0
  %v229 = vmul.f32 %v226, %v173
  %231 = vrot.lane.b32.xlu0 %v228, 64
  %v232 = vpop.permute.xlu0 %231
  %v234 = vmul.f32 %v226, %v232
  %236 = vrot.lane.b32.xlu0 %v234, 32
  %v237 = vpop.permute.xlu0 %236
  %v239 = vadd.f32 %v229, %v237
  %v240 = vtanh.pop %v239
  %242 = vrot.lane.b32.xlu0 %v240, 64
  %v243 = vpop.permute.xlu0 %242
  %v245 = vmul.f32 %v226, %v243
  %247 = vrot.lane.b32.xlu0 %v245, 32
  %v248 = vpop.permute.xlu0 %247
  %s250 = scalar_lea.vmem [#allocation2], 8
  %251 = vst.msk [vmem:[%s250] sm:$0xff] %vm124, %v248
  %s252 = scalar_lea.vmem [#allocation3], 16
  %v253 = vld [vmem:[%s252] sm:$0xff]
  %v254 = vpack.c.bf16 %v245, %v245
  %256 = vrot.lane.b32.xlu0 %v254, 32
  %v257 = vpop.permute.xlu0 %256
  %v259 = vsel %vm124, %v257, 0
  %261 = vmatpush.bf16.msra.mxu0 0
  %262 = vmatpush.bf16.msra.mxu0 0
  %263 = vmatpush.bf16.msra.mxu0 0
  %264 = vmatpush.bf16.msra.mxu0 0
  %265 = vmatpush.bf16.msra.mxu0 0
  %266 = vmatpush.bf16.msra.mxu0 0
  %267 = vmatpush.bf16.msra.mxu0 %v121
  %268 = vmatpush.bf16.msra.mxu0 %v120
  %269 = vmatmul.bf16.gmra.mxu0 %v259
  %v270 = vpop.f32.mrf.mxu0
  %v271 = vadd.f32 0.0, %v270
  %v272 = vpop.f32.mrf.mxu0
  %273 = vdwg.mxu0
  %v274 = vadd.f32 %v253, %v271
  %v275 = vxor.u32 %v274, 2147483648
  %v276 = vmul.f32 %v275, 1.442695
  %v277 = vpow.pop %v276
  %v278 = vadd.f32 %v277, 1.0
  %v279 = vrcp.pop %v278
  %v280 = vmul.f32 %v278, %v279
  %v281 = vsub.f32 1.0, %v280
  %v282 = vmul.f32 %v279, %v281
  %v283 = vadd.f32 %v279, %v282
  %vm284 = vweird.f32 %v278
  %vm285 = vweird.f32 %v279
  %vm286 = vmor %vm284, %vm285
  %v287 = vsel %vm286, %v279, %v283
  %v288 = vand.u32 2147483647, %v278
  %vm289 = vcmp.eq.f32.partialorder %v288, 8.507059e+37
  %v290 = vand.u32 %v278, 2147483648
  %v291 = vor.u32 1.1754944e-38, %v290
  %v292 = vsel %vm289, %v291, %v287
  %v293 = vmul.f32 1.0, %v292
  %v294 = vmul.f32 %v293, 2.0
  %v295 = vsub.f32 %v294, 1.0
  %v296 = vmul.f32 %v293, %v239
  %298 = vrot.lane.b32.xlu0 %v295, 64
  %v299 = vpop.permute.xlu0 %298
  %v301 = vmul.f32 %v293, %v299
  %303 = vrot.lane.b32.xlu0 %v301, 32
  %v304 = vpop.permute.xlu0 %303
  %v306 = vadd.f32 %v296, %v304
  %v307 = vtanh.pop %v306
  %309 = vrot.lane.b32.xlu0 %v307, 64
  %v310 = vpop.permute.xlu0 %309
  %v312 = vmul.f32 %v293, %v310
  %314 = vrot.lane.b32.xlu0 %v312, 32
  %v315 = vpop.permute.xlu0 %314
  %s317 = scalar_lea.vmem [#allocation2], 16
  %318 = vst.msk [vmem:[%s317] sm:$0xff] %vm124, %v315
  %s319 = scalar_lea.vmem [#allocation3], 24
  %v320 = vld [vmem:[%s319] sm:$0xff]
  %v321 = vpack.c.bf16 %v312, %v312
  %323 = vrot.lane.b32.xlu0 %v321, 32
  %v324 = vpop.permute.xlu0 %323
  %v326 = vsel %vm124, %v324, 0
  %328 = vmatpush.bf16.msra.mxu0 0
  %329 = vmatpush.bf16.msra.mxu0 0
  %330 = vmatpush.bf16.msra.mxu0 0
  %331 = vmatpush.bf16.msra.mxu0 0
  %332 = vmatpush.bf16.msra.mxu0 0
  %333 = vmatpush.bf16.msra.mxu0 0
  %334 = vmatpush.bf16.msra.mxu0 %v121
  %335 = vmatpush.bf16.msra.mxu0 %v120
  %336 = vmatmul.bf16.gmra.mxu0 %v326
  %v337 = vpop.f32.mrf.mxu0
  %v338 = vadd.f32 0.0, %v337
  %v339 = vpop.f32.mrf.mxu0
  %340 = vdwg.mxu0
  %v341 = vadd.f32 %v320, %v338
  %v342 = vxor.u32 %v341, 2147483648
  %v343 = vmul.f32 %v342, 1.442695
  %v344 = vpow.pop %v343
  %v345 = vadd.f32 %v344, 1.0
  %v346 = vrcp.pop %v345
  %v347 = vmul.f32 %v345, %v346
  %v348 = vsub.f32 1.0, %v347
  %v349 = vmul.f32 %v346, %v348
  %v350 = vadd.f32 %v346, %v349
  %vm351 = vweird.f32 %v345
  %vm352 = vweird.f32 %v346
  %vm353 = vmor %vm351, %vm352
  %v354 = vsel %vm353, %v346, %v350
  %v355 = vand.u32 2147483647, %v345
  %vm356 = vcmp.eq.f32.partialorder %v355, 8.507059e+37
  %v357 = vand.u32 %v345, 2147483648
  %v358 = vor.u32 1.1754944e-38, %v357
  %v359 = vsel %vm356, %v358, %v354
  %v360 = vmul.f32 1.0, %v359
  %v361 = vmul.f32 %v360, 2.0
  %v362 = vsub.f32 %v361, 1.0
  %v363 = vmul.f32 %v360, %v306
  %365 = vrot.lane.b32.xlu0 %v362, 64
  %v366 = vpop.permute.xlu0 %365
  %v368 = vmul.f32 %v360, %v366
  %370 = vrot.lane.b32.xlu0 %v368, 32
  %v371 = vpop.permute.xlu0 %370
  %v373 = vadd.f32 %v363, %v371
  %v374 = vtanh.pop %v373
  %376 = vrot.lane.b32.xlu0 %v374, 64
  %v377 = vpop.permute.xlu0 %376
  %v379 = vmul.f32 %v360, %v377
  %381 = vrot.lane.b32.xlu0 %v379, 32
  %v382 = vpop.permute.xlu0 %381
  %s384 = scalar_lea.vmem [#allocation2], 24
  %385 = vst.msk [vmem:[%s384] sm:$0xff] %vm124, %v382
  %s386 = scalar_lea.vmem [#allocation3], 32
  %v387 = vld [vmem:[%s386] sm:$0xff]
  %v388 = vpack.c.bf16 %v379, %v379
  %390 = vrot.lane.b32.xlu0 %v388, 32
  %v391 = vpop.permute.xlu0 %390
  %v393 = vsel %vm124, %v391, 0
  %395 = vmatpush.bf16.msra.mxu0 0
  %396 = vmatpush.bf16.msra.mxu0 0
  %397 = vmatpush.bf16.msra.mxu0 0
  %398 = vmatpush.bf16.msra.mxu0 0
  %399 = vmatpush.bf16.msra.mxu0 0
  %400 = vmatpush.bf16.msra.mxu0 0
  %401 = vmatpush.bf16.msra.mxu0 %v121
  %402 = vmatpush.bf16.msra.mxu0 %v120
  %403 = vmatmul.bf16.gmra.mxu0 %v393
  %v404 = vpop.f32.mrf.mxu0
  %v405 = vadd.f32 0.0, %v404
  %v406 = vpop.f32.mrf.mxu0
  %407 = vdwg.mxu0
  %v408 = vadd.f32 %v387, %v405
  %v409 = vxor.u32 %v408, 2147483648
  %v410 = vmul.f32 %v409, 1.442695
  %v411 = vpow.pop %v410
  %v412 = vadd.f32 %v411, 1.0
  %v413 = vrcp.pop %v412
  %v414 = vmul.f32 %v412, %v413
  %v415 = vsub.f32 1.0, %v414
  %v416 = vmul.f32 %v413, %v415
  %v417 = vadd.f32 %v413, %v416
  %vm418 = vweird.f32 %v412
  %vm419 = vweird.f32 %v413
  %vm420 = vmor %vm418, %vm419
  %v421 = vsel %vm420, %v413, %v417
  %v422 = vand.u32 2147483647, %v412
  %vm423 = vcmp.eq.f32.partialorder %v422, 8.507059e+37
  %v424 = vand.u32 %v412, 2147483648
  %v425 = vor.u32 1.1754944e-38, %v424
  %v426 = vsel %vm423, %v425, %v421
  %v427 = vmul.f32 1.0, %v426
  %v428 = vmul.f32 %v427, 2.0
  %v429 = vsub.f32 %v428, 1.0
  %v430 = vmul.f32 %v427, %v373
  %432 = vrot.lane.b32.xlu0 %v429, 64
  %v433 = vpop.permute.xlu0 %432
  %v435 = vmul.f32 %v427, %v433
  %437 = vrot.lane.b32.xlu0 %v435, 32
  %v438 = vpop.permute.xlu0 %437
  %v440 = vadd.f32 %v430, %v438
  %v441 = vtanh.pop %v440
  %443 = vrot.lane.b32.xlu0 %v441, 64
  %v444 = vpop.permute.xlu0 %443
  %v446 = vmul.f32 %v427, %v444
  %448 = vrot.lane.b32.xlu0 %v446, 32
  %v449 = vpop.permute.xlu0 %448
  %s451 = scalar_lea.vmem [#allocation2], 32
  %452 = vst.msk [vmem:[%s451] sm:$0xff] %vm124, %v449
  %s453 = scalar_lea.vmem [#allocation3], 40
  %v454 = vld [vmem:[%s453] sm:$0xff]
  %v455 = vpack.c.bf16 %v446, %v446
  %457 = vrot.lane.b32.xlu0 %v455, 32
  %v458 = vpop.permute.xlu0 %457
  %v460 = vsel %vm124, %v458, 0
  %462 = vmatpush.bf16.msra.mxu0 0
  %463 = vmatpush.bf16.msra.mxu0 0
  %464 = vmatpush.bf16.msra.mxu0 0
  %465 = vmatpush.bf16.msra.mxu0 0
  %466 = vmatpush.bf16.msra.mxu0 0
  %467 = vmatpush.bf16.msra.mxu0 0
  %468 = vmatpush.bf16.msra.mxu0 %v121
  %469 = vmatpush.bf16.msra.mxu0 %v120
  %470 = vmatmul.bf16.gmra.mxu0 %v460
  %v471 = vpop.f32.mrf.mxu0
  %v472 = vadd.f32 0.0, %v471
  %v473 = vpop.f32.mrf.mxu0
  %474 = vdwg.mxu0
  %v475 = vadd.f32 %v454, %v472
  %v476 = vxor.u32 %v475, 2147483648
  %v477 = vmul.f32 %v476, 1.442695
  %v478 = vpow.pop %v477
  %v479 = vadd.f32 %v478, 1.0
  %v480 = vrcp.pop %v479
  %v481 = vmul.f32 %v479, %v480
  %v482 = vsub.f32 1.0, %v481
  %v483 = vmul.f32 %v480, %v482
  %v484 = vadd.f32 %v480, %v483
  %vm485 = vweird.f32 %v479
  %vm486 = vweird.f32 %v480
  %vm487 = vmor %vm485, %vm486
  %v488 = vsel %vm487, %v480, %v484
  %v489 = vand.u32 2147483647, %v479
  %vm490 = vcmp.eq.f32.partialorder %v489, 8.507059e+37
  %v491 = vand.u32 %v479, 2147483648
  %v492 = vor.u32 1.1754944e-38, %v491
  %v493 = vsel %vm490, %v492, %v488
  %v494 = vmul.f32 1.0, %v493
  %v495 = vmul.f32 %v494, 2.0
  %v496 = vsub.f32 %v495, 1.0
  %v497 = vmul.f32 %v494, %v440
  %499 = vrot.lane.b32.xlu0 %v496, 64
  %v500 = vpop.permute.xlu0 %499
  %v502 = vmul.f32 %v494, %v500
  %504 = vrot.lane.b32.xlu0 %v502, 32
  %v505 = vpop.permute.xlu0 %504
  %v507 = vadd.f32 %v497, %v505
  %v508 = vtanh.pop %v507
  %510 = vrot.lane.b32.xlu0 %v508, 64
  %v511 = vpop.permute.xlu0 %510
  %v513 = vmul.f32 %v494, %v511
  %515 = vrot.lane.b32.xlu0 %v513, 32
  %v516 = vpop.permute.xlu0 %515
  %s518 = scalar_lea.vmem [#allocation2], 40
  %519 = vst.msk [vmem:[%s518] sm:$0xff] %vm124, %v516
  %s520 = scalar_lea.vmem [#allocation3], 48
  %v521 = vld [vmem:[%s520] sm:$0xff]
  %v522 = vpack.c.bf16 %v513, %v513
  %524 = vrot.lane.b32.xlu0 %v522, 32
  %v525 = vpop.permute.xlu0 %524
  %v527 = vsel %vm124, %v525, 0
  %529 = vmatpush.bf16.msra.mxu0 0
  %530 = vmatpush.bf16.msra.mxu0 0
  %531 = vmatpush.bf16.msra.mxu0 0
  %532 = vmatpush.bf16.msra.mxu0 0
  %533 = vmatpush.bf16.msra.mxu0 0
  %534 = vmatpush.bf16.msra.mxu0 0
  %535 = vmatpush.bf16.msra.mxu0 %v121
  %536 = vmatpush.bf16.msra.mxu0 %v120
  %537 = vmatmul.bf16.gmra.mxu0 %v527
  %v538 = vpop.f32.mrf.mxu0
  %v539 = vadd.f32 0.0, %v538
  %v540 = vpop.f32.mrf.mxu0
  %541 = vdwg.mxu0
  %v542 = vadd.f32 %v521, %v539
  %v543 = vxor.u32 %v542, 2147483648
  %v544 = vmul.f32 %v543, 1.442695
  %v545 = vpow.pop %v544
  %v546 = vadd.f32 %v545, 1.0
  %v547 = vrcp.pop %v546
  %v548 = vmul.f32 %v546, %v547
  %v549 = vsub.f32 1.0, %v548
  %v550 = vmul.f32 %v547, %v549
  %v551 = vadd.f32 %v547, %v550
  %vm552 = vweird.f32 %v546
  %vm553 = vweird.f32 %v547
  %vm554 = vmor %vm552, %vm553
  %v555 = vsel %vm554, %v547, %v551
  %v556 = vand.u32 2147483647, %v546
  %vm557 = vcmp.eq.f32.partialorder %v556, 8.507059e+37
  %v558 = vand.u32 %v546, 2147483648
  %v559 = vor.u32 1.1754944e-38, %v558
  %v560 = vsel %vm557, %v559, %v555
  %v561 = vmul.f32 1.0, %v560
  %v562 = vmul.f32 %v561, 2.0
  %v563 = vsub.f32 %v562, 1.0
  %v564 = vmul.f32 %v561, %v507
  %566 = vrot.lane.b32.xlu0 %v563, 64
  %v567 = vpop.permute.xlu0 %566
  %v569 = vmul.f32 %v561, %v567
  %571 = vrot.lane.b32.xlu0 %v569, 32
  %v572 = vpop.permute.xlu0 %571
  %v574 = vadd.f32 %v564, %v572
  %v575 = vtanh.pop %v574
  %577 = vrot.lane.b32.xlu0 %v575, 64
  %v578 = vpop.permute.xlu0 %577
  %v580 = vmul.f32 %v561, %v578
  %582 = vrot.lane.b32.xlu0 %v580, 32
  %v583 = vpop.permute.xlu0 %582
  %s585 = scalar_lea.vmem [#allocation2], 48
  %586 = vst.msk [vmem:[%s585] sm:$0xff] %vm124, %v583
  %s587 = scalar_lea.vmem [#allocation3], 56
  %v588 = vld [vmem:[%s587] sm:$0xff]
  %v589 = vpack.c.bf16 %v580, %v580
  %591 = vrot.lane.b32.xlu0 %v589, 32
  %v592 = vpop.permute.xlu0 %591
  %v594 = vsel %vm124, %v592, 0
  %596 = vmatpush.bf16.msra.mxu0 0
  %597 = vmatpush.bf16.msra.mxu0 0
  %598 = vmatpush.bf16.msra.mxu0 0
  %599 = vmatpush.bf16.msra.mxu0 0
  %600 = vmatpush.bf16.msra.mxu0 0
  %601 = vmatpush.bf16.msra.mxu0 0
  %602 = vmatpush.bf16.msra.mxu0 %v121
  %603 = vmatpush.bf16.msra.mxu0 %v120
  %604 = vmatmul.bf16.gmra.mxu0 %v594
  %v605 = vpop.f32.mrf.mxu0
  %v606 = vadd.f32 0.0, %v605
  %v607 = vpop.f32.mrf.mxu0
  %608 = vdwg.mxu0
  %v609 = vadd.f32 %v588, %v606
  %v610 = vxor.u32 %v609, 2147483648
  %v611 = vmul.f32 %v610, 1.442695
  %v612 = vpow.pop %v611
  %v613 = vadd.f32 %v612, 1.0
  %v614 = vrcp.pop %v613
  %v615 = vmul.f32 %v613, %v614
  %v616 = vsub.f32 1.0, %v615
  %v617 = vmul.f32 %v614, %v616
  %v618 = vadd.f32 %v614, %v617
  %vm619 = vweird.f32 %v613
  %vm620 = vweird.f32 %v614
  %vm621 = vmor %vm619, %vm620
  %v622 = vsel %vm621, %v614, %v618
  %v623 = vand.u32 2147483647, %v613
  %vm624 = vcmp.eq.f32.partialorder %v623, 8.507059e+37
  %v625 = vand.u32 %v613, 2147483648
  %v626 = vor.u32 1.1754944e-38, %v625
  %v627 = vsel %vm624, %v626, %v622
  %v628 = vmul.f32 1.0, %v627
  %v629 = vmul.f32 %v628, 2.0
  %v630 = vsub.f32 %v629, 1.0
  %v631 = vmul.f32 %v628, %v574
  %633 = vrot.lane.b32.xlu0 %v630, 64
  %v634 = vpop.permute.xlu0 %633
  %v636 = vmul.f32 %v628, %v634
  %638 = vrot.lane.b32.xlu0 %v636, 32
  %v639 = vpop.permute.xlu0 %638
  %v641 = vadd.f32 %v631, %v639
  %v642 = vtanh.pop %v641
  %644 = vrot.lane.b32.xlu0 %v642, 64
  %v645 = vpop.permute.xlu0 %644
  %v647 = vmul.f32 %v628, %v645
  %649 = vrot.lane.b32.xlu0 %v647, 32
  %v650 = vpop.permute.xlu0 %649
  %s652 = scalar_lea.vmem [#allocation2], 56
  %653 = vst.msk [vmem:[%s652] sm:$0xff] %vm124, %v650
  %v654 = vld [vmem:[#allocation2] sm:$0xff]
  %v655 = vld [vmem:[#allocation2 + $0x8] sm:$0xff]
  %v656 = vld [vmem:[#allocation2 + $0x10] sm:$0xff]
  %v657 = vld [vmem:[#allocation2 + $0x18] sm:$0xff]
  %v658 = vld [vmem:[#allocation2 + $0x20] sm:$0xff]
  %v659 = vld [vmem:[#allocation2 + $0x28] sm:$0xff]
  %v660 = vld [vmem:[#allocation2 + $0x30] sm:$0xff]
  %v661 = vld [vmem:[#allocation2 + $0x38] sm:$0xff]
  %v662 = vpack.c.bf16 %v655, %v654
  %v663 = vpack.c.bf16 %v657, %v656
  %v664 = vpack.c.bf16 %v659, %v658
  %v665 = vpack.c.bf16 %v661, %v660
  %v666 = vld [vmem:[%s4] sm:$0xf]
  %v667 = vld [vmem:[%s4 + $0x4] sm:$0xf]
  %v668 = vld [vmem:[%s4 + $0x8] sm:$0xf]
  %v669 = vld [vmem:[%s4 + $0xc] sm:$0xf]
  %v670 = vld [vmem:[%s6] sm:$0x1]
  %v672 = vperm.slane %v670, 0
  %v678 = vunpack.c.l.b16 %v666
  %v679 = vunpack.c.l.b16 %v667
  %v680 = vunpack.c.l.b16 %v668
  %v681 = vunpack.c.l.b16 %v669
  %v682 = vpack.c.b16 %v679, %v678
  %v683 = vpack.c.b16 %v681, %v680
  %v687 = vsel %vm124, %v662, 0
  %v690 = vsel %vm124, %v663, 0
  %v693 = vsel %vm124, %v664, 0
  %v696 = vsel %vm124, %v665, 0
  %698 = vmatpush.bf16.msra.mxu0 0
  %699 = vmatpush.bf16.msra.mxu0 0
  %700 = vmatpush.bf16.msra.mxu0 0
  %701 = vmatpush.bf16.msra.mxu0 0
  %702 = vmatpush.bf16.msra.mxu0 0
  %703 = vmatpush.bf16.msra.mxu0 0
  %704 = vmatpush.bf16.msra.mxu0 %v683
  %705 = vmatpush.bf16.msra.mxu0 %v682
  %706 = vmatmul.bf16.gmra.mxu0 %v687
  %v707 = vpop.f32.mrf.mxu0
  %v708 = vadd.f32 %v672, %v707
  %v709 = vpop.f32.mrf.mxu0
  %v710 = vadd.f32 %v672, %v709
  %711 = vmatmul.bf16.gmra.mxu0 %v690
  %v712 = vpop.f32.mrf.mxu0
  %v713 = vadd.f32 %v672, %v712
  %v714 = vpop.f32.mrf.mxu0
  %v715 = vadd.f32 %v672, %v714
  %716 = vmatmul.bf16.gmra.mxu0 %v693
  %v717 = vpop.f32.mrf.mxu0
  %v718 = vadd.f32 %v672, %v717
  %v719 = vpop.f32.mrf.mxu0
  %v720 = vadd.f32 %v672, %v719
  %721 = vmatmul.bf16.gmra.mxu0 %v696
  %v722 = vpop.f32.mrf.mxu0
  %v723 = vadd.f32 %v672, %v722
  %v724 = vpop.f32.mrf.mxu0
  %v725 = vadd.f32 %v672, %v724
  %726 = vdwg.mxu0
  %727 = vst [vmem:[#allocation3] sm:$0xff] %v708
  %728 = vst [vmem:[#allocation3 + $0x8] sm:$0xff] %v710
  %729 = vst [vmem:[#allocation3 + $0x10] sm:$0xff] %v713
  %730 = vst [vmem:[#allocation3 + $0x18] sm:$0xff] %v715
  %731 = vst [vmem:[#allocation3 + $0x20] sm:$0xff] %v718
  %732 = vst [vmem:[#allocation3 + $0x28] sm:$0xff] %v720
  %733 = vst [vmem:[#allocation3 + $0x30] sm:$0xff] %v723
  %734 = vst [vmem:[#allocation3 + $0x38] sm:$0xff] %v725
  %v735 = vld [vmem:[%s5] sm:$0xf]
  %v736 = vld [vmem:[%s5 + $0x4] sm:$0xf]
  %v737 = vld [vmem:[%s5 + $0x8] sm:$0xf]
  %v738 = vld [vmem:[%s5 + $0xc] sm:$0xf]
  %v739 = vld [vmem:[#allocation3] sm:$0xff]
  %v744 = vunpack.c.l.b16 %v735
  %v745 = vunpack.c.l.b16 %v736
  %v746 = vunpack.c.l.b16 %v737
  %v747 = vunpack.c.l.b16 %v738
  %v748 = vpack.c.b16 %v745, %v744
  %v749 = vpack.c.b16 %v747, %v746
  %752 = vmatpush.bf16.msra.mxu0 0
  %753 = vmatpush.bf16.msra.mxu0 0
  %754 = vmatpush.bf16.msra.mxu0 0
  %755 = vmatpush.bf16.msra.mxu0 0
  %756 = vmatpush.bf16.msra.mxu0 0
  %757 = vmatpush.bf16.msra.mxu0 0
  %758 = vmatpush.bf16.msra.mxu0 %v749
  %759 = vmatpush.bf16.msra.mxu0 %v748
  %760 = vmatmul.bf16.gmra.mxu0 %v126
  %v761 = vpop.f32.mrf.mxu0
  %v762 = vadd.f32 0.0, %v761
  %v763 = vpop.f32.mrf.mxu0
  %764 = vdwg.mxu0
  %v765 = vadd.f32 %v739, %v762
  %v766 = vxor.u32 %v765, 2147483648
  %v767 = vmul.f32 %v766, 1.442695
  %v768 = vpow.pop %v767
  %v769 = vadd.f32 %v768, 1.0
  %v770 = vrcp.pop %v769
  %v771 = vmul.f32 %v769, %v770
  %v772 = vsub.f32 1.0, %v771
  %v773 = vmul.f32 %v770, %v772
  %v774 = vadd.f32 %v770, %v773
  %vm775 = vweird.f32 %v769
  %vm776 = vweird.f32 %v770
  %vm777 = vmor %vm775, %vm776
  %v778 = vsel %vm777, %v770, %v774
  %v779 = vand.u32 2147483647, %v769
  %vm780 = vcmp.eq.f32.partialorder %v779, 8.507059e+37
  %v781 = vand.u32 %v769, 2147483648
  %v782 = vor.u32 1.1754944e-38, %v781
  %v783 = vsel %vm780, %v782, %v778
  %v784 = vmul.f32 1.0, %v783
  %v785 = vmul.f32 %v784, 2.0
  %v786 = vsub.f32 %v785, 1.0
  %v787 = vmul.f32 %v784, 0.0
  %789 = vrot.lane.b32.xlu0 %v786, 64
  %v790 = vpop.permute.xlu0 %789
  %v792 = vmul.f32 %v784, %v790
  %794 = vrot.lane.b32.xlu0 %v792, 32
  %v795 = vpop.permute.xlu0 %794
  %v797 = vadd.f32 %v787, %v795
  %v798 = vtanh.pop %v797
  %800 = vrot.lane.b32.xlu0 %v798, 64
  %v801 = vpop.permute.xlu0 %800
  %v803 = vmul.f32 %v784, %v801
  %v804 = vld [vmem:[%s185] sm:$0xff]
  %v805 = vpack.c.bf16 %v803, %v803
  %807 = vrot.lane.b32.xlu0 %v805, 32
  %v808 = vpop.permute.xlu0 %807
  %v810 = vsel %vm124, %v808, 0
  %812 = vmatpush.bf16.msra.mxu0 0
  %813 = vmatpush.bf16.msra.mxu0 0
  %814 = vmatpush.bf16.msra.mxu0 0
  %815 = vmatpush.bf16.msra.mxu0 0
  %816 = vmatpush.bf16.msra.mxu0 0
  %817 = vmatpush.bf16.msra.mxu0 0
  %818 = vmatpush.bf16.msra.mxu0 %v749
  %819 = vmatpush.bf16.msra.mxu0 %v748
  %820 = vmatmul.bf16.gmra.mxu0 %v810
  %v821 = vpop.f32.mrf.mxu0
  %v822 = vadd.f32 0.0, %v821
  %v823 = vpop.f32.mrf.mxu0
  %824 = vdwg.mxu0
  %v825 = vadd.f32 %v804, %v822
  %v826 = vxor.u32 %v825, 2147483648
  %v827 = vmul.f32 %v826, 1.442695
  %v828 = vpow.pop %v827
  %v829 = vadd.f32 %v828, 1.0
  %v830 = vrcp.pop %v829
  %v831 = vmul.f32 %v829, %v830
  %v832 = vsub.f32 1.0, %v831
  %v833 = vmul.f32 %v830, %v832
  %v834 = vadd.f32 %v830, %v833
  %vm835 = vweird.f32 %v829
  %vm836 = vweird.f32 %v830
  %vm837 = vmor %vm835, %vm836
  %v838 = vsel %vm837, %v830, %v834
  %v839 = vand.u32 2147483647, %v829
  %vm840 = vcmp.eq.f32.partialorder %v839, 8.507059e+37
  %v841 = vand.u32 %v829, 2147483648
  %v842 = vor.u32 1.1754944e-38, %v841
  %v843 = vsel %vm840, %v842, %v838
  %v844 = vmul.f32 1.0, %v843
  %v845 = vmul.f32 %v844, 2.0
  %v846 = vsub.f32 %v845, 1.0
  %v847 = vmul.f32 %v844, %v797
  %849 = vrot.lane.b32.xlu0 %v846, 64
  %v850 = vpop.permute.xlu0 %849
  %v852 = vmul.f32 %v844, %v850
  %854 = vrot.lane.b32.xlu0 %v852, 32
  %v855 = vpop.permute.xlu0 %854
  %v857 = vadd.f32 %v847, %v855
  %v858 = vtanh.pop %v857
  %860 = vrot.lane.b32.xlu0 %v858, 64
  %v861 = vpop.permute.xlu0 %860
  %v863 = vmul.f32 %v844, %v861
  %v864 = vld [vmem:[%s252] sm:$0xff]
  %v865 = vpack.c.bf16 %v863, %v863
  %867 = vrot.lane.b32.xlu0 %v865, 32
  %v868 = vpop.permute.xlu0 %867
  %v870 = vsel %vm124, %v868, 0
  %872 = vmatpush.bf16.msra.mxu0 0
  %873 = vmatpush.bf16.msra.mxu0 0
  %874 = vmatpush.bf16.msra.mxu0 0
  %875 = vmatpush.bf16.msra.mxu0 0
  %876 = vmatpush.bf16.msra.mxu0 0
  %877 = vmatpush.bf16.msra.mxu0 0
  %878 = vmatpush.bf16.msra.mxu0 %v749
  %879 = vmatpush.bf16.msra.mxu0 %v748
  %880 = vmatmul.bf16.gmra.mxu0 %v870
  %v881 = vpop.f32.mrf.mxu0
  %v882 = vadd.f32 0.0, %v881
  %v883 = vpop.f32.mrf.mxu0
  %884 = vdwg.mxu0
  %v885 = vadd.f32 %v864, %v882
  %v886 = vxor.u32 %v885, 2147483648
  %v887 = vmul.f32 %v886, 1.442695
  %v888 = vpow.pop %v887
  %v889 = vadd.f32 %v888, 1.0
  %v890 = vrcp.pop %v889
  %v891 = vmul.f32 %v889, %v890
  %v892 = vsub.f32 1.0, %v891
  %v893 = vmul.f32 %v890, %v892
  %v894 = vadd.f32 %v890, %v893
  %vm895 = vweird.f32 %v889
  %vm896 = vweird.f32 %v890
  %vm897 = vmor %vm895, %vm896
  %v898 = vsel %vm897, %v890, %v894
  %v899 = vand.u32 2147483647, %v889
  %vm900 = vcmp.eq.f32.partialorder %v899, 8.507059e+37
  %v901 = vand.u32 %v889, 2147483648
  %v902 = vor.u32 1.1754944e-38, %v901
  %v903 = vsel %vm900, %v902, %v898
  %v904 = vmul.f32 1.0, %v903
  %v905 = vmul.f32 %v904, 2.0
  %v906 = vsub.f32 %v905, 1.0
  %v907 = vmul.f32 %v904, %v857
  %909 = vrot.lane.b32.xlu0 %v906, 64
  %v910 = vpop.permute.xlu0 %909
  %v912 = vmul.f32 %v904, %v910
  %914 = vrot.lane.b32.xlu0 %v912, 32
  %v915 = vpop.permute.xlu0 %914
  %v917 = vadd.f32 %v907, %v915
  %v918 = vtanh.pop %v917
  %920 = vrot.lane.b32.xlu0 %v918, 64
  %v921 = vpop.permute.xlu0 %920
  %v923 = vmul.f32 %v904, %v921
  %v924 = vld [vmem:[%s319] sm:$0xff]
  %v925 = vpack.c.bf16 %v923, %v923
  %927 = vrot.lane.b32.xlu0 %v925, 32
  %v928 = vpop.permute.xlu0 %927
  %v930 = vsel %vm124, %v928, 0
  %932 = vmatpush.bf16.msra.mxu0 0
  %933 = vmatpush.bf16.msra.mxu0 0
  %934 = vmatpush.bf16.msra.mxu0 0
  %935 = vmatpush.bf16.msra.mxu0 0
  %936 = vmatpush.bf16.msra.mxu0 0
  %937 = vmatpush.bf16.msra.mxu0 0
  %938 = vmatpush.bf16.msra.mxu0 %v749
  %939 = vmatpush.bf16.msra.mxu0 %v748
  %940 = vmatmul.bf16.gmra.mxu0 %v930
  %v941 = vpop.f32.mrf.mxu0
  %v942 = vadd.f32 0.0, %v941
  %v943 = vpop.f32.mrf.mxu0
  %944 = vdwg.mxu0
  %v945 = vadd.f32 %v924, %v942
  %v946 = vxor.u32 %v945, 2147483648
  %v947 = vmul.f32 %v946, 1.442695
  %v948 = vpow.pop %v947
  %v949 = vadd.f32 %v948, 1.0
  %v950 = vrcp.pop %v949
  %v951 = vmul.f32 %v949, %v950
  %v952 = vsub.f32 1.0, %v951
  %v953 = vmul.f32 %v950, %v952
  %v954 = vadd.f32 %v950, %v953
  %vm955 = vweird.f32 %v949
  %vm956 = vweird.f32 %v950
  %vm957 = vmor %vm955, %vm956
  %v958 = vsel %vm957, %v950, %v954
  %v959 = vand.u32 2147483647, %v949
  %vm960 = vcmp.eq.f32.partialorder %v959, 8.507059e+37
  %v961 = vand.u32 %v949, 2147483648
  %v962 = vor.u32 1.1754944e-38, %v961
  %v963 = vsel %vm960, %v962, %v958
  %v964 = vmul.f32 1.0, %v963
  %v965 = vmul.f32 %v964, 2.0
  %v966 = vsub.f32 %v965, 1.0
  %v967 = vmul.f32 %v964, %v917
  %969 = vrot.lane.b32.xlu0 %v966, 64
  %v970 = vpop.permute.xlu0 %969
  %v972 = vmul.f32 %v964, %v970
  %974 = vrot.lane.b32.xlu0 %v972, 32
  %v975 = vpop.permute.xlu0 %974
  %v977 = vadd.f32 %v967, %v975
  %v978 = vtanh.pop %v977
  %980 = vrot.lane.b32.xlu0 %v978, 64
  %v981 = vpop.permute.xlu0 %980
  %v983 = vmul.f32 %v964, %v981
  %v984 = vld [vmem:[%s386] sm:$0xff]
  %v985 = vpack.c.bf16 %v983, %v983
  %987 = vrot.lane.b32.xlu0 %v985, 32
  %v988 = vpop.permute.xlu0 %987
  %v990 = vsel %vm124, %v988, 0
  %992 = vmatpush.bf16.msra.mxu0 0
  %993 = vmatpush.bf16.msra.mxu0 0
  %994 = vmatpush.bf16.msra.mxu0 0
  %995 = vmatpush.bf16.msra.mxu0 0
  %996 = vmatpush.bf16.msra.mxu0 0
  %997 = vmatpush.bf16.msra.mxu0 0
  %998 = vmatpush.bf16.msra.mxu0 %v749
  %999 = vmatpush.bf16.msra.mxu0 %v748
  %1000 = vmatmul.bf16.gmra.mxu0 %v990
  %v1001 = vpop.f32.mrf.mxu0
  %v1002 = vadd.f32 0.0, %v1001
  %v1003 = vpop.f32.mrf.mxu0
  %1004 = vdwg.mxu0
  %v1005 = vadd.f32 %v984, %v1002
  %v1006 = vxor.u32 %v1005, 2147483648
  %v1007 = vmul.f32 %v1006, 1.442695
  %v1008 = vpow.pop %v1007
  %v1009 = vadd.f32 %v1008, 1.0
  %v1010 = vrcp.pop %v1009
  %v1011 = vmul.f32 %v1009, %v1010
  %v1012 = vsub.f32 1.0, %v1011
  %v1013 = vmul.f32 %v1010, %v1012
  %v1014 = vadd.f32 %v1010, %v1013
  %vm1015 = vweird.f32 %v1009
  %vm1016 = vweird.f32 %v1010
  %vm1017 = vmor %vm1015, %vm1016
  %v1018 = vsel %vm1017, %v1010, %v1014
  %v1019 = vand.u32 2147483647, %v1009
  %vm1020 = vcmp.eq.f32.partialorder %v1019, 8.507059e+37
  %v1021 = vand.u32 %v1009, 2147483648
  %v1022 = vor.u32 1.1754944e-38, %v1021
  %v1023 = vsel %vm1020, %v1022, %v1018
  %v1024 = vmul.f32 1.0, %v1023
  %v1025 = vmul.f32 %v1024, 2.0
  %v1026 = vsub.f32 %v1025, 1.0
  %v1027 = vmul.f32 %v1024, %v977
  %1029 = vrot.lane.b32.xlu0 %v1026, 64
  %v1030 = vpop.permute.xlu0 %1029
  %v1032 = vmul.f32 %v1024, %v1030
  %1034 = vrot.lane.b32.xlu0 %v1032, 32
  %v1035 = vpop.permute.xlu0 %1034
  %v1037 = vadd.f32 %v1027, %v1035
  %v1038 = vtanh.pop %v1037
  %1040 = vrot.lane.b32.xlu0 %v1038, 64
  %v1041 = vpop.permute.xlu0 %1040
  %v1043 = vmul.f32 %v1024, %v1041
  %v1044 = vld [vmem:[%s453] sm:$0xff]
  %v1045 = vpack.c.bf16 %v1043, %v1043
  %1047 = vrot.lane.b32.xlu0 %v1045, 32
  %v1048 = vpop.permute.xlu0 %1047
  %v1050 = vsel %vm124, %v1048, 0
  %1052 = vmatpush.bf16.msra.mxu0 0
  %1053 = vmatpush.bf16.msra.mxu0 0
  %1054 = vmatpush.bf16.msra.mxu0 0
  %1055 = vmatpush.bf16.msra.mxu0 0
  %1056 = vmatpush.bf16.msra.mxu0 0
  %1057 = vmatpush.bf16.msra.mxu0 0
  %1058 = vmatpush.bf16.msra.mxu0 %v749
  %1059 = vmatpush.bf16.msra.mxu0 %v748
  %1060 = vmatmul.bf16.gmra.mxu0 %v1050
  %v1061 = vpop.f32.mrf.mxu0
  %v1062 = vadd.f32 0.0, %v1061
  %v1063 = vpop.f32.mrf.mxu0
  %1064 = vdwg.mxu0
  %v1065 = vadd.f32 %v1044, %v1062
  %v1066 = vxor.u32 %v1065, 2147483648
  %v1067 = vmul.f32 %v1066, 1.442695
  %v1068 = vpow.pop %v1067
  %v1069 = vadd.f32 %v1068, 1.0
  %v1070 = vrcp.pop %v1069
  %v1071 = vmul.f32 %v1069, %v1070
  %v1072 = vsub.f32 1.0, %v1071
  %v1073 = vmul.f32 %v1070, %v1072
  %v1074 = vadd.f32 %v1070, %v1073
  %vm1075 = vweird.f32 %v1069
  %vm1076 = vweird.f32 %v1070
  %vm1077 = vmor %vm1075, %vm1076
  %v1078 = vsel %vm1077, %v1070, %v1074
  %v1079 = vand.u32 2147483647, %v1069
  %vm1080 = vcmp.eq.f32.partialorder %v1079, 8.507059e+37
  %v1081 = vand.u32 %v1069, 2147483648
  %v1082 = vor.u32 1.1754944e-38, %v1081
  %v1083 = vsel %vm1080, %v1082, %v1078
  %v1084 = vmul.f32 1.0, %v1083
  %v1085 = vmul.f32 %v1084, 2.0
  %v1086 = vsub.f32 %v1085, 1.0
  %v1087 = vmul.f32 %v1084, %v1037
  %1089 = vrot.lane.b32.xlu0 %v1086, 64
  %v1090 = vpop.permute.xlu0 %1089
  %v1092 = vmul.f32 %v1084, %v1090
  %1094 = vrot.lane.b32.xlu0 %v1092, 32
  %v1095 = vpop.permute.xlu0 %1094
  %v1097 = vadd.f32 %v1087, %v1095
  %v1098 = vtanh.pop %v1097
  %1100 = vrot.lane.b32.xlu0 %v1098, 64
  %v1101 = vpop.permute.xlu0 %1100
  %v1103 = vmul.f32 %v1084, %v1101
  %v1104 = vld [vmem:[%s520] sm:$0xff]
  %v1105 = vpack.c.bf16 %v1103, %v1103
  %1107 = vrot.lane.b32.xlu0 %v1105, 32
  %v1108 = vpop.permute.xlu0 %1107
  %v1110 = vsel %vm124, %v1108, 0
  %1112 = vmatpush.bf16.msra.mxu0 0
  %1113 = vmatpush.bf16.msra.mxu0 0
  %1114 = vmatpush.bf16.msra.mxu0 0
  %1115 = vmatpush.bf16.msra.mxu0 0
  %1116 = vmatpush.bf16.msra.mxu0 0
  %1117 = vmatpush.bf16.msra.mxu0 0
  %1118 = vmatpush.bf16.msra.mxu0 %v749
  %1119 = vmatpush.bf16.msra.mxu0 %v748
  %1120 = vmatmul.bf16.gmra.mxu0 %v1110
  %v1121 = vpop.f32.mrf.mxu0
  %v1122 = vadd.f32 0.0, %v1121
  %v1123 = vpop.f32.mrf.mxu0
  %1124 = vdwg.mxu0
  %v1125 = vadd.f32 %v1104, %v1122
  %v1126 = vxor.u32 %v1125, 2147483648
  %v1127 = vmul.f32 %v1126, 1.442695
  %v1128 = vpow.pop %v1127
  %v1129 = vadd.f32 %v1128, 1.0
  %v1130 = vrcp.pop %v1129
  %v1131 = vmul.f32 %v1129, %v1130
  %v1132 = vsub.f32 1.0, %v1131
  %v1133 = vmul.f32 %v1130, %v1132
  %v1134 = vadd.f32 %v1130, %v1133
  %vm1135 = vweird.f32 %v1129
  %vm1136 = vweird.f32 %v1130
  %vm1137 = vmor %vm1135, %vm1136
  %v1138 = vsel %vm1137, %v1130, %v1134
  %v1139 = vand.u32 2147483647, %v1129
  %vm1140 = vcmp.eq.f32.partialorder %v1139, 8.507059e+37
  %v1141 = vand.u32 %v1129, 2147483648
  %v1142 = vor.u32 1.1754944e-38, %v1141
  %v1143 = vsel %vm1140, %v1142, %v1138
  %v1144 = vmul.f32 1.0, %v1143
  %v1145 = vmul.f32 %v1144, 2.0
  %v1146 = vsub.f32 %v1145, 1.0
  %v1147 = vmul.f32 %v1144, %v1097
  %1149 = vrot.lane.b32.xlu0 %v1146, 64
  %v1150 = vpop.permute.xlu0 %1149
  %v1152 = vmul.f32 %v1144, %v1150
  %1154 = vrot.lane.b32.xlu0 %v1152, 32
  %v1155 = vpop.permute.xlu0 %1154
  %v1157 = vadd.f32 %v1147, %v1155
  %v1158 = vtanh.pop %v1157
  %1160 = vrot.lane.b32.xlu0 %v1158, 64
  %v1161 = vpop.permute.xlu0 %1160
  %v1163 = vmul.f32 %v1144, %v1161
  %v1164 = vld [vmem:[%s587] sm:$0xff]
  %v1165 = vpack.c.bf16 %v1163, %v1163
  %1167 = vrot.lane.b32.xlu0 %v1165, 32
  %v1168 = vpop.permute.xlu0 %1167
  %v1170 = vsel %vm124, %v1168, 0
  %1172 = vmatpush.bf16.msra.mxu0 0
  %1173 = vmatpush.bf16.msra.mxu0 0
  %1174 = vmatpush.bf16.msra.mxu0 0
  %1175 = vmatpush.bf16.msra.mxu0 0
  %1176 = vmatpush.bf16.msra.mxu0 0
  %1177 = vmatpush.bf16.msra.mxu0 0
  %1178 = vmatpush.bf16.msra.mxu0 %v749
  %1179 = vmatpush.bf16.msra.mxu0 %v748
  %1180 = vmatmul.bf16.gmra.mxu0 %v1170
  %v1181 = vpop.f32.mrf.mxu0
  %v1182 = vadd.f32 0.0, %v1181
  %v1183 = vpop.f32.mrf.mxu0
  %1184 = vdwg.mxu0
  %v1185 = vadd.f32 %v1164, %v1182
  %v1186 = vxor.u32 %v1185, 2147483648
  %v1187 = vmul.f32 %v1186, 1.442695
  %v1188 = vpow.pop %v1187
  %v1189 = vadd.f32 %v1188, 1.0
  %v1190 = vrcp.pop %v1189
  %v1191 = vmul.f32 %v1189, %v1190
  %v1192 = vsub.f32 1.0, %v1191
  %v1193 = vmul.f32 %v1190, %v1192
  %v1194 = vadd.f32 %v1190, %v1193
  %vm1195 = vweird.f32 %v1189
  %vm1196 = vweird.f32 %v1190
  %vm1197 = vmor %vm1195, %vm1196
  %v1198 = vsel %vm1197, %v1190, %v1194
  %v1199 = vand.u32 2147483647, %v1189
  %vm1200 = vcmp.eq.f32.partialorder %v1199, 8.507059e+37
  %v1201 = vand.u32 %v1189, 2147483648
  %v1202 = vor.u32 1.1754944e-38, %v1201
  %v1203 = vsel %vm1200, %v1202, %v1198
  %v1204 = vmul.f32 1.0, %v1203
  %v1205 = vmul.f32 %v1204, 2.0
  %v1206 = vsub.f32 %v1205, 1.0
  %v1207 = vmul.f32 %v1204, %v1157
  %1209 = vrot.lane.b32.xlu0 %v1206, 64
  %v1210 = vpop.permute.xlu0 %1209
  %v1212 = vmul.f32 %v1204, %v1210
  %1214 = vrot.lane.b32.xlu0 %v1212, 32
  %v1215 = vpop.permute.xlu0 %1214
  %v1217 = vadd.f32 %v1207, %v1215
  %v1218 = vtanh.pop %v1217
  %1220 = vrot.lane.b32.xlu0 %v1218, 64
  %v1221 = vpop.permute.xlu0 %1220
  %v1223 = vmul.f32 %v1204, %v1221
  %v1224 = vld [vmem:[%s7] sm:$0xff]
  %v1225 = vld [vmem:[%s7 + $0x8] sm:$0xff]
  %v1226 = vld [vmem:[%s7 + $0x10] sm:$0xff]
  %v1227 = vld [vmem:[%s7 + $0x18] sm:$0xff]
  %v1228 = vld [vmem:[%s8] sm:$0x1]
  %v1230 = vperm.slane %v1228, 0
  %1233 = vrot.lane.b32.xlu0 %v1223, 32
  %v1234 = vpop.permute.xlu0 %1233
  %v1235 = vsel %vm124, %v1234, 0
  %1237 = vmatpush.msra.mxu0 0.0
  %1238 = vmatpush.msra.mxu0 0.0
  %1239 = vmatpush.msra.mxu0 0.0
  %1240 = vmatpush.msra.mxu0 0.0
  %1241 = vmatpush.msra.mxu0 0.0
  %1242 = vmatpush.msra.mxu0 0.0
  %1243 = vmatpush.msra.mxu0 0.0
  %1244 = vmatpush.msra.mxu0 0.0
  %1245 = vmatpush.msra.mxu0 0.0
  %1246 = vmatpush.msra.mxu0 0.0
  %1247 = vmatpush.msra.mxu0 0.0
  %1248 = vmatpush.msra.mxu0 0.0
  %1249 = vmatpush.msra.mxu0 %v1227
  %1250 = vmatpush.msra.mxu0 %v1226
  %1251 = vmatpush.msra.mxu0 %v1225
  %1252 = vmatpush.msra.mxu0 %v1224
  %1253 = vmatmul.f32.gmra.mxu0 %v1235
  %v1254 = vpop.f32.mrf.mxu0
  %v1255 = vadd.f32 %v1230, %v1254
  %1256 = vdwg.mxu0
  %1257 = vst [vmem:[%s9] sm:$0xff] %v1255
  // Predicated region
  $region38: #{my_lstm_forward.1} parent=0 // pred_check
    _
  $region39: #{my_lstm_forward.1} parent=0 // pred_check_branch
    %1259 = sbr.rel (0) target = $region41
  $region40: #{my_lstm_forward.1} parent=0 // pred_region
    _
  $region41: #{my_lstm_forward.1} parent=0 // pred_fallthru
    _
  // Predicated region
  $region42: #{my_lstm_forward.1} parent=0 // pred_check
    _
  $region43: #{my_lstm_forward.1} parent=0 // pred_check_branch
    %1261 = sbr.rel (0) target = $region45
  $region44: #{my_lstm_forward.1} parent=0 // pred_region
    _
  $region45: #{my_lstm_forward.1} parent=0 // pred_fallthru
    _

</llo_original>
